<compile_context>
chip_gen: v7x
topology: tpu7x:2x2x1
jax: 0.10.0
libtpu: 0.0.40
codegen_flags: <defaults>
</compile_context>

<pallas_src>
import functools

import jax
import jax.numpy as jnp
from jax.experimental import pallas as pl
from jax.experimental.pallas import tpu as pltpu


def _round_up(x, m):
    return (x + m - 1) // m * m


# --------------------------------------------------------------------------
# VMEM sizing helpers (per-generation budgets, lane/sublane-padded estimates)
# --------------------------------------------------------------------------
def _vmem_budgets():
    """Returns (tile_budget_bytes, vmem_limit_bytes) for this TPU generation."""
    try:
        cap = int(pltpu.get_tpu_info().vmem_capacity_bytes)
    except Exception:
        cap = 64 * 2**20                       # conservative: v7x per-core VMEM
    if cap >= 96 * 2**20:                      # v5e / v6e: 128 MiB per core
        return 56 * 2**20, 100 * 2**20
    return 18 * 2**20, 44 * 2**20              # v7x: 64 MiB -> leave headroom


def _pad2d_bytes(rows, cols, itemsize):
    """Bytes a (rows, cols) buffer actually occupies in VMEM (tile padding)."""
    sub = 16 if itemsize == 2 else 8
    return _round_up(max(rows, 1), sub) * _round_up(max(cols, 1), 128) * itemsize


def _est_vmem_bytes(th, wp, cin, cout):
    m = th * wp
    b = 2 * _pad2d_bytes(m, cin, 2)            # input tile (double-buffered, bf16)
    b += 2 * _pad2d_bytes(m, cout, 2)          # output tile (double-buffered, bf16)
    b += 4 * _pad2d_bytes(wp, cin, 2)          # 2 halo rows (double-buffered)
    b += _pad2d_bytes(m, 3 * cin, 2)           # ky-packed MXU operand scratch
    b += _pad2d_bytes(m, 3 * cout, 4)          # matmul result (f32)
    b += 5 * _pad2d_bytes(m, cout, 4)          # kx slabs / rolled temps / acc / epilogue
    b += 2 * _pad2d_bytes(3 * cin, 3 * cout, 2)  # weights (double-buffered)
    b += 4 * _pad2d_bytes(1, cout, 4)          # BN scale / shift
    return b


def _pick_tile_rows(N, H, Wp, feats, budget_bytes, max_rows=256):
    cap = max(2, min(H, max_rows))
    if N == 1:
        # keep >= 2 row tiles so both v7x TensorCores get work
        cap = max(2, min(cap, (H + 1) // 2))
    for t in range(cap, 1, -1):
        if _est_vmem_bytes(t, Wp, feats, feats) <= budget_bytes:
            return t
    return 2


# --------------------------------------------------------------------------
# Pallas kernel: one row tile of  3x3 conv + folded BN + optional ReLU
# --------------------------------------------------------------------------
def _conv3x3_kernel(xc_ref, xt_ref, xb_ref, w_ref, scale_ref, shift_ref,
                    out_ref, x_sc, *, TH, W, Wp, Cin, Cout, relu, pad_rows):
    # xc_ref:    (1, TH, Wp, Cin)  center rows of the tile (bf16)
    # xt_ref:    (1, 1,  Wp, Cin)  row above the tile (clamped at image top)
    # xb_ref:    (1, 1,  Wp, Cin)  row below the tile (clamped at image bottom)
    # w_ref:     (3*Cin, 3*Cout)   Wcat[kh*Cin+ci, kw*Cout+co] (bf16)
    # scale/shift: (1, Cout) f32   folded BatchNorm affine
    # out_ref:   (1, TH, Wp, Cout)
    # x_sc:      (TH*Wp, 3*Cin)    VMEM scratch: ky-packed MXU operand
    i = pl.program_id(1)
    n_tiles = pl.num_programs(1)
    M = TH * Wp
    dt = xc_ref.dtype

    # ---- assemble the ky-packed operand:  X[h*Wp+w, kh*Cin+ci] = in[h+kh-1, w, ci]
    xc = xc_ref[0]                                             # (TH, Wp, Cin)
    x_sc[:, Cin:2 * Cin] = xc.reshape(M, Cin)                  # kh = 1 (center)
    x_sc[Wp:, 0:Cin] = xc[:TH - 1].reshape((TH - 1) * Wp, Cin)        # kh = 0
    x_sc[:(TH - 1) * Wp, 2 * Cin:] = xc[1:].reshape((TH - 1) * Wp, Cin)  # kh = 2

    # halo rows; zero at the image top / bottom (conv zero padding)
    @pl.when(i > 0)
    def _():
        x_sc[0:Wp, 0:Cin] = xt_ref[0, 0]

    @pl.when(i == 0)
    def _():
        x_sc[0:Wp, 0:Cin] = jnp.zeros((Wp, Cin), dt)

    @pl.when(i < n_tiles - 1)
    def _():
        x_sc[(TH - 1) * Wp:, 2 * Cin:] = xb_ref[0, 0]

    @pl.when(i == n_tiles - 1)
    def _():
        x_sc[(TH - 1) * Wp:, 2 * Cin:] = jnp.zeros((Wp, Cin), dt)

    # ---- ONE MXU matmul; the 3 kx taps are folded into the output dimension
    y_all = jnp.dot(x_sc[...], w_ref[...],
                    preferred_element_type=jnp.float32)        # (M, 3*Cout) f32

    # Output col w needs input col w + kx - 1.  Y_kx evaluated at a stored
    # zero-pad column is exactly 0, so rolling the f32 output slabs along the
    # flattened (h, w) axis is exact; cross-row wraps land on pad columns that
    # are re-zeroed below.
    y0 = y_all[:, 0:Cout]                                      # kx = 0
    y1 = y_all[:, Cout:2 * Cout]                               # kx = 1
    y2 = y_all[:, 2 * Cout:]                                   # kx = 2
    acc = y1 + pltpu.roll(y0, shift=1, axis=0) \
             + pltpu.roll(y2, shift=M - 1, axis=0)

    y = acc * scale_ref[...] + shift_ref[...]                  # folded BN (f32)
    if relu:
        y = jnp.maximum(y, 0.0)
    out_ref[0] = y.reshape(TH, Wp, Cout).astype(out_ref.dtype)

    # keep stored zero-pad columns exactly zero for the next layer (slice stores)
    out_ref[0, :, 0:1, :] = jnp.zeros((TH, 1, Cout), out_ref.dtype)
    out_ref[0, :, W + 1:, :] = jnp.zeros((TH, Wp - W - 1, Cout), out_ref.dtype)

    if pad_rows > 0:
        # keep the H-padding rows exactly zero (they feed the next layer's halo)
        @pl.when(i == n_tiles - 1)
        def _():
            out_ref[0, TH - pad_rows:, :, :] = \
                jnp.zeros((pad_rows, Wp, Cout), out_ref.dtype)


# --------------------------------------------------------------------------
# Per-layer wrapper
# --------------------------------------------------------------------------
def conv3x3_bn_relu(x, w_cat, scale, shift, *, width, real_height, relu,
                    tile_rows, vmem_limit_bytes):
    """One DnCNN layer on (W, H)-padded NHWC bf16 activations.

    x:      (N, Hp, Wp, Cin) bf16; col 0 / cols >= width+1 and rows >= real_height
            are zero padding (maintained by the kernels)
    w_cat:  (3*Cin, 3*Cout) bf16, Wcat[kh*Cin+ci, kw*Cout+co]
    scale/shift: (1, Cout) f32 folded BatchNorm affine
    """
    N, Hp, Wp, Cin = x.shape
    K3, N3 = w_cat.shape
    assert K3 == 3 * Cin and N3 % 3 == 0
    Cout = N3 // 3
    TH = tile_rows
    assert TH >= 2 and Hp % TH == 0, (Hp, TH)
    nT = Hp // TH
    pad_rows = Hp - real_height
    assert 0 <= pad_rows < TH, (Hp, real_height, TH)

    kern = functools.partial(_conv3x3_kernel, TH=TH, W=width, Wp=Wp, Cin=Cin,
                             Cout=Cout, relu=relu, pad_rows=pad_rows)

    return pl.pallas_call(
        kern,
        out_shape=jax.ShapeDtypeStruct((N, Hp, Wp, Cout), x.dtype),
        grid_spec=pltpu.PrefetchScalarGridSpec(
            num_scalar_prefetch=0,
            grid=(N, nT),
            in_specs=[
                # center rows of the tile
                pl.BlockSpec((1, TH, Wp, Cin), lambda n, i: (n, i, 0, 0)),
                # one-row halo above (clamped at the top; zeroed in-kernel)
                pl.BlockSpec((1, 1, Wp, Cin),
                             lambda n, i: (n, jnp.maximum(i * TH - 1, 0), 0, 0)),
                # one-row halo below (clamped at the bottom; zeroed in-kernel)
                pl.BlockSpec((1, 1, Wp, Cin),
                             lambda n, i: (n, jnp.minimum((i + 1) * TH, Hp - 1), 0, 0)),
                # weights / BN affine: constant index map -> resident in VMEM
                pl.BlockSpec((3 * Cin, 3 * Cout), lambda n, i: (0, 0)),
                pl.BlockSpec((1, Cout), lambda n, i: (0, 0)),
                pl.BlockSpec((1, Cout), lambda n, i: (0, 0)),
            ],
            out_specs=pl.BlockSpec((1, TH, Wp, Cout), lambda n, i: (n, i, 0, 0)),
            scratch_shapes=[pltpu.VMEM((TH * Wp, 3 * Cin), x.dtype)],
        ),
        compiler_params=pltpu.CompilerParams(
            dimension_semantics=("parallel", "parallel"),
            vmem_limit_bytes=vmem_limit_bytes),
    )(x, x, x, w_cat, scale, shift)


# --------------------------------------------------------------------------
# DnCNN parameter construction (deterministic, synthetic; BN folded, eval mode)
# --------------------------------------------------------------------------
def init_dncnn_params(key, channels, num_of_layers=17, features=64):
    """Returns a list of layer dicts {'w', 'scale', 'shift', 'relu'} (torch OIHW w)."""
    eps = 1e-5
    layers = []

    def conv_w(k, cout, cin):
        return jax.random.normal(k, (cout, cin, 3, 3), jnp.float32) * 0.1

    # first layer: conv(channels -> features) + ReLU (no BN)
    key, k = jax.random.split(key)
    layers.append(dict(w=conv_w(k, features, channels),
                       scale=jnp.ones((features,), jnp.float32),
                       shift=jnp.zeros((features,), jnp.float32),
                       relu=True))

    # middle layers: conv(features -> features) + BN (folded, eval) + ReLU
    for _ in range(num_of_layers - 2):
        key, kw, kg, kb, km, kv = jax.random.split(key, 6)
        w = conv_w(kw, features, features)
        gamma = 1.0 + 0.1 * jax.random.normal(kg, (features,), jnp.float32)
        beta = 0.1 * jax.random.normal(kb, (features,), jnp.float32)
        r_mean = 0.1 * jax.random.normal(km, (features,), jnp.float32)
        r_var = 1.0 + 0.1 * jax.random.uniform(kv, (features,), jnp.float32)
        scale = gamma / jnp.sqrt(r_var + eps)
        shift = beta - r_mean * scale
        layers.append(dict(w=w, scale=scale, shift=shift, relu=True))

    # last layer: conv(features -> channels), no BN, no ReLU
    key, k = jax.random.split(key)
    layers.append(dict(w=conv_w(k, channels, features),
                       scale=jnp.ones((channels,), jnp.float32),
                       shift=jnp.zeros((channels,), jnp.float32),
                       relu=False))
    return layers


# --------------------------------------------------------------------------
# Forward pass (layout plumbing: NCHW <-> padded NHWC bf16, weight re-layout)
# --------------------------------------------------------------------------
def _prep_layer(layer):
    """Torch OIHW conv weight + folded BN -> (Wcat, scale, shift, cout, relu)."""
    w = layer['w']                                   # (Cout, Cin, KH, KW)
    cout, cin = w.shape[0], w.shape[1]
    cout_p = _round_up(cout, 8)                      # pad degenerate Cout (last layer)
    wcat = jnp.transpose(w, (2, 1, 3, 0))            # (KH, Cin, KW, Cout)
    if cout_p > cout:
        wcat = jnp.pad(wcat, ((0, 0), (0, 0), (0, 0), (0, cout_p - cout)))
    wcat = wcat.reshape(3 * cin, 3 * cout_p).astype(jnp.bfloat16)
    scale = jnp.pad(layer['scale'], (0, cout_p - cout)).reshape(1, cout_p)
    shift = jnp.pad(layer['shift'], (0, cout_p - cout)).reshape(1, cout_p)
    return wcat, scale.astype(jnp.float32), shift.astype(jnp.float32), cout, layer['relu']


def dncnn_forward(x_nchw, layers, *, tile_rows=None):
    N, C, H, W = x_nchw.shape
    assert H >= 2 and W >= 2
    Wp = _round_up(W + 2, 8)
    budget, vmem_limit = _vmem_budgets()
    feats = layers[0]['w'].shape[0]                  # 64 for DnCNN
    TH = tile_rows if tile_rows is not None else _pick_tile_rows(N, H, Wp, feats, budget)
    TH = max(2, min(TH, H))
    Hp = _round_up(H, TH)

    x = jnp.transpose(x_nchw, (0, 2, 3, 1)).astype(jnp.bfloat16)       # NHWC
    # one-time padding: col 0 / cols >= W+1 and rows >= H are zero (maintained by kernels)
    x = jnp.pad(x, ((0, 0), (0, Hp - H), (1, Wp - W - 1), (0, 0)))

    for layer in layers:
        wcat, scale, shift, _, relu = _prep_layer(layer)
        x = conv3x3_bn_relu(x, wcat, scale, shift, width=W, real_height=H,
                            relu=relu, tile_rows=TH,
                            vmem_limit_bytes=vmem_limit)

    cout_last = layers[-1]['w'].shape[0]
    x = x[:, :H, 1:W + 1, :cout_last]                # drop H/W/channel padding
    return jnp.transpose(x, (0, 3, 1, 2)).astype(jnp.float32)          # -> NCHW


# --------------------------------------------------------------------------
# Pure-JAX reference (f32) for correctness checking
# --------------------------------------------------------------------------
def dncnn_reference(x_nchw, layers):
    x = x_nchw
    for layer in layers:
        y = jax.lax.conv_general_dilated(
            x, layer['w'], window_strides=(1, 1), padding=((1, 1), (1, 1)),
            dimension_numbers=('NCHW', 'OIHW', 'NCHW'))
        y = y * layer['scale'][None, :, None, None] + \
            layer['shift'][None, :, None, None]
        if layer['relu']:
            y = jnp.maximum(y, 0.0)
        x = y
    return x


def _check(out, ref):
    ref_max = float(jnp.max(jnp.abs(ref)))
    ref_nrm = float(jnp.linalg.norm(ref))
    max_err = float(jnp.max(jnp.abs(out - ref)))
    rel_fro = float(jnp.linalg.norm(out - ref)) / (ref_nrm + 1e-6)
    # bf16 activations/weights -> looser tolerance than a pure-f32 path, but
    # still far below what any tap/halo misalignment would produce.
    assert max_err <= 0.1 * (ref_max + 1e-6) and rel_fro <= 6e-2, (max_err, rel_fro)


if __name__ == "__main__":
    key = jax.random.PRNGKey(0)
    key, kx_, kp, kx2 = jax.random.split(key, 4)

    # Small shapes: batch=2, channels=4, spatial=16x16, num_of_layers=5
    channels, num_of_layers = 4, 5
    N, H, W = 2, 16, 16
    x = jax.random.normal(kx_, (N, channels, H, W), jnp.float32)
    layers = init_dncnn_params(kp, channels, num_of_layers=num_of_layers)

    ref = jax.block_until_ready(dncnn_reference(x, layers))
    # tile_rows=8 exercises the multi-tile halo path; None -> auto tile choice.
    for tr in (8, None):
        out = jax.block_until_ready(dncnn_forward(x, layers, tile_rows=tr))
        assert out.shape == ref.shape == x.shape
        _check(out, ref)

    # Odd image height (non-divisible by the row tile) exercises the H-padding
    # and single-image (N=1) grid-balance paths.
    x2 = jax.random.normal(kx2, (1, channels, 13, W), jnp.float32)
    ref2 = jax.block_until_ready(dncnn_reference(x2, layers))
    out2 = jax.block_until_ready(dncnn_forward(x2, layers))
    assert out2.shape == ref2.shape == x2.shape
    _check(out2, ref2)

    print("KERNEL_OK")
</pallas_src>

<mosaic_0001>
module attributes {stable_mosaic.version = 11 : i64} {
  func.func @_conv3x3_kernel(%arg0: i32, %arg1: i32, %arg2: memref<1x8x24x4xbf16, #tpu.memory_space<vmem>>, %arg3: memref<1x1x24x4xbf16, #tpu.memory_space<vmem>>, %arg4: memref<1x1x24x4xbf16, #tpu.memory_space<vmem>>, %arg5: memref<12x192xbf16, #tpu.memory_space<vmem>>, %arg6: memref<1x64xf32, #tpu.memory_space<vmem>>, %arg7: memref<1x64xf32, #tpu.memory_space<vmem>>, %arg8: memref<1x8x24x64xbf16, #tpu.memory_space<vmem>>, %arg9: memref<192x12xbf16, #tpu.memory_space<vmem>>) attributes {dimension_semantics = [#tpu.dimension_semantics<parallel>, #tpu.dimension_semantics<parallel>], iteration_bounds = array<i64: 2, 2>, scalar_prefetch = 0 : i64, scratch_operands = 1 : i64, tpu.core_type = #tpu.core_type<tc>, window_params = [{transform_indices = @transform_0, window_bounds = array<i64: 1, 8, 24, 4>}, {transform_indices = @transform_1, window_bounds = array<i64: 1, 1, 24, 4>}, {transform_indices = @transform_2, window_bounds = array<i64: 1, 1, 24, 4>}, {pipeline_mode = #tpu.pipeline_mode<synchronous>, transform_indices = @transform_3, window_bounds = array<i64: 12, 192>}, {pipeline_mode = #tpu.pipeline_mode<synchronous>, transform_indices = @transform_4, window_bounds = array<i64: 1, 64>}, {pipeline_mode = #tpu.pipeline_mode<synchronous>, transform_indices = @transform_5, window_bounds = array<i64: 1, 64>}, {transform_indices = @transform_6, window_bounds = array<i64: 1, 8, 24, 64>}]} {
    %c0 = arith.constant 0 : index
    %c0_0 = arith.constant 0 : index
    %c0_1 = arith.constant 0 : index
    %c0_2 = arith.constant 0 : index
    %0 = vector.load %arg2[%c0, %c0_0, %c0_1, %c0_2] : memref<1x8x24x4xbf16, #tpu.memory_space<vmem>>, vector<1x8x24x4xbf16>
    %1 = vector.shape_cast %0 : vector<1x8x24x4xbf16> to vector<8x24x4xbf16>
    %2 = vector.shape_cast %1 : vector<8x24x4xbf16> to vector<192x4xbf16>
    %c0_3 = arith.constant 0 : index
    %c4 = arith.constant 4 : index
    %3 = vector.load %arg9[%c0_3, %c4] : memref<192x12xbf16, #tpu.memory_space<vmem>>, vector<192x4xbf16>
    tpu.vector_store %arg9[%c0_3, %c4], %2 {strides = array<i32>} : memref<192x12xbf16, #tpu.memory_space<vmem>>, vector<192x4xbf16>,
    %4 = vector.extract_strided_slice %1 {offsets = [0, 0, 0], sizes = [7, 24, 4], strides = [1, 1, 1]} : vector<8x24x4xbf16> to vector<7x24x4xbf16>
    %5 = vector.shape_cast %4 : vector<7x24x4xbf16> to vector<168x4xbf16>
    %c24 = arith.constant 24 : index
    %c0_4 = arith.constant 0 : index
    %6 = vector.load %arg9[%c24, %c0_4] : memref<192x12xbf16, #tpu.memory_space<vmem>>, vector<168x4xbf16>
    tpu.vector_store %arg9[%c24, %c0_4], %5 {strides = array<i32>} : memref<192x12xbf16, #tpu.memory_space<vmem>>, vector<168x4xbf16>,
    %7 = vector.extract_strided_slice %1 {offsets = [1, 0, 0], sizes = [7, 24, 4], strides = [1, 1, 1]} : vector<8x24x4xbf16> to vector<7x24x4xbf16>
    %8 = vector.shape_cast %7 : vector<7x24x4xbf16> to vector<168x4xbf16>
    %c0_5 = arith.constant 0 : index
    %c8 = arith.constant 8 : index
    %9 = vector.load %arg9[%c0_5, %c8] : memref<192x12xbf16, #tpu.memory_space<vmem>>, vector<168x4xbf16>
    tpu.vector_store %arg9[%c0_5, %c8], %8 {strides = array<i32>} : memref<192x12xbf16, #tpu.memory_space<vmem>>, vector<168x4xbf16>,
    %c0_i32 = arith.constant 0 : i32
    %10 = arith.cmpi sgt, %arg1, %c0_i32 : i32
    %11 = arith.extui %10 : i1 to i32
    %c0_i32_6 = arith.constant 0 : i32
    %12 = arith.cmpi ne, %11, %c0_i32_6 : i32
    scf.if %12 {
      %c0_35 = arith.constant 0 : index
      %c0_36 = arith.constant 0 : index
      %c0_37 = arith.constant 0 : index
      %c0_38 = arith.constant 0 : index
      %53 = vector.load %arg3[%c0_35, %c0_36, %c0_37, %c0_38] : memref<1x1x24x4xbf16, #tpu.memory_space<vmem>>, vector<1x1x24x4xbf16>
      %54 = vector.shape_cast %53 : vector<1x1x24x4xbf16> to vector<24x4xbf16>
      %c0_39 = arith.constant 0 : index
      %c0_40 = arith.constant 0 : index
      %55 = vector.load %arg9[%c0_39, %c0_40] : memref<192x12xbf16, #tpu.memory_space<vmem>>, vector<24x4xbf16>
      tpu.vector_store %arg9[%c0_39, %c0_40], %54 {strides = array<i32>} : memref<192x12xbf16, #tpu.memory_space<vmem>>, vector<24x4xbf16>,
    } else {
    }
    %c0_i32_7 = arith.constant 0 : i32
    %13 = arith.cmpi eq, %arg1, %c0_i32_7 : i32
    %14 = arith.extui %13 : i1 to i32
    %c0_i32_8 = arith.constant 0 : i32
    %15 = arith.cmpi ne, %14, %c0_i32_8 : i32
    scf.if %15 {
      %cst_35 = arith.constant 0.000000e+00 : bf16
      %53 = vector.broadcast %cst_35 : bf16 to vector<24x4xbf16>
      %c0_36 = arith.constant 0 : index
      %c0_37 = arith.constant 0 : index
      %54 = vector.load %arg9[%c0_36, %c0_37] : memref<192x12xbf16, #tpu.memory_space<vmem>>, vector<24x4xbf16>
      tpu.vector_store %arg9[%c0_36, %c0_37], %53 {strides = array<i32>} : memref<192x12xbf16, #tpu.memory_space<vmem>>, vector<24x4xbf16>,
    } else {
    }
    %c1_i32 = arith.constant 1 : i32
    %16 = arith.cmpi slt, %arg1, %c1_i32 : i32
    %17 = arith.extui %16 : i1 to i32
    %c0_i32_9 = arith.constant 0 : i32
    %18 = arith.cmpi ne, %17, %c0_i32_9 : i32
    scf.if %18 {
      %c0_35 = arith.constant 0 : index
      %c0_36 = arith.constant 0 : index
      %c0_37 = arith.constant 0 : index
      %c0_38 = arith.constant 0 : index
      %53 = vector.load %arg4[%c0_35, %c0_36, %c0_37, %c0_38] : memref<1x1x24x4xbf16, #tpu.memory_space<vmem>>, vector<1x1x24x4xbf16>
      %54 = vector.shape_cast %53 : vector<1x1x24x4xbf16> to vector<24x4xbf16>
      %c168 = arith.constant 168 : index
      %c8_39 = arith.constant 8 : index
      %55 = vector.load %arg9[%c168, %c8_39] : memref<192x12xbf16, #tpu.memory_space<vmem>>, vector<24x4xbf16>
      tpu.vector_store %arg9[%c168, %c8_39], %54 {strides = array<i32>} : memref<192x12xbf16, #tpu.memory_space<vmem>>, vector<24x4xbf16>,
    } else {
    }
    %c1_i32_10 = arith.constant 1 : i32
    %19 = arith.cmpi eq, %arg1, %c1_i32_10 : i32
    %20 = arith.extui %19 : i1 to i32
    %c0_i32_11 = arith.constant 0 : i32
    %21 = arith.cmpi ne, %20, %c0_i32_11 : i32
    scf.if %21 {
      %cst_35 = arith.constant 0.000000e+00 : bf16
      %53 = vector.broadcast %cst_35 : bf16 to vector<24x4xbf16>
      %c168 = arith.constant 168 : index
      %c8_36 = arith.constant 8 : index
      %54 = vector.load %arg9[%c168, %c8_36] : memref<192x12xbf16, #tpu.memory_space<vmem>>, vector<24x4xbf16>
      tpu.vector_store %arg9[%c168, %c8_36], %53 {strides = array<i32>} : memref<192x12xbf16, #tpu.memory_space<vmem>>, vector<24x4xbf16>,
    } else {
    }
    %c0_12 = arith.constant 0 : index
    %c0_13 = arith.constant 0 : index
    %22 = vector.load %arg9[%c0_12, %c0_13] : memref<192x12xbf16, #tpu.memory_space<vmem>>, vector<192x12xbf16>
    %c0_14 = arith.constant 0 : index
    %c0_15 = arith.constant 0 : index
    %23 = vector.load %arg5[%c0_14, %c0_15] : memref<12x192xbf16, #tpu.memory_space<vmem>>, vector<12x192xbf16>
    %cst = arith.constant dense<0.000000e+00> : vector<192x192xf32>
    %24 = tpu.matmul %22, %23, %cst {dimension_numbers = #tpu.dot_dimension_numbers<[1], [0], [0], [1], [0, 0, 1, 1], [], []>} : vector<192x12xbf16>, vector<12x192xbf16>, vector<192x192xf32> -> vector<192x192xf32>
    %25 = vector.extract_strided_slice %24 {offsets = [0, 0], sizes = [192, 64], strides = [1, 1]} : vector<192x192xf32> to vector<192x64xf32>
    %26 = vector.extract_strided_slice %24 {offsets = [0, 64], sizes = [192, 64], strides = [1, 1]} : vector<192x192xf32> to vector<192x64xf32>
    %27 = vector.extract_strided_slice %24 {offsets = [0, 128], sizes = [192, 64], strides = [1, 1]} : vector<192x192xf32> to vector<192x64xf32>
    %c1_i32_16 = arith.constant 1 : i32
    %28 = tpu.dynamic_rotate %25 by %c1_i32_16 dim 0 : vector<192x64xf32>, i32 -> vector<192x64xf32>
    %29 = arith.addf %26, %28 : vector<192x64xf32>
    %c191_i32 = arith.constant 191 : i32
    %30 = tpu.dynamic_rotate %27 by %c191_i32 dim 0 : vector<192x64xf32>, i32 -> vector<192x64xf32>
    %31 = arith.addf %29, %30 : vector<192x64xf32>
    %c0_17 = arith.constant 0 : index
    %c0_18 = arith.constant 0 : index
    %32 = vector.load %arg6[%c0_17, %c0_18] : memref<1x64xf32, #tpu.memory_space<vmem>>, vector<1x64xf32>
    %33 = vector.broadcast %32 : vector<1x64xf32> to vector<192x64xf32>
    %34 = arith.mulf %31, %33 : vector<192x64xf32>
    %c0_19 = arith.constant 0 : index
    %c0_20 = arith.constant 0 : index
    %35 = vector.load %arg7[%c0_19, %c0_20] : memref<1x64xf32, #tpu.memory_space<vmem>>, vector<1x64xf32>
    %36 = vector.broadcast %35 : vector<1x64xf32> to vector<192x64xf32>
    %37 = arith.addf %34, %36 : vector<192x64xf32>
    %cst_21 = arith.constant 0.000000e+00 : f32
    %38 = vector.broadcast %cst_21 : f32 to vector<192x64xf32>
    %39 = arith.maximumf %37, %38 : vector<192x64xf32>
    %40 = vector.shape_cast %39 : vector<192x64xf32> to vector<8x24x64xf32>
    %41 = arith.truncf %40 : vector<8x24x64xf32> to vector<8x24x64xbf16>
    %c0_22 = arith.constant 0 : index
    %c0_23 = arith.constant 0 : index
    %c0_24 = arith.constant 0 : index
    %c0_25 = arith.constant 0 : index
    %42 = vector.load %arg8[%c0_22, %c0_23, %c0_24, %c0_25] : memref<1x8x24x64xbf16, #tpu.memory_space<vmem>>, vector<1x8x24x64xbf16>
    %43 = vector.shape_cast %42 : vector<1x8x24x64xbf16> to vector<8x24x64xbf16>
    %44 = vector.shape_cast %41 : vector<8x24x64xbf16> to vector<1x8x24x64xbf16>
    tpu.vector_store %arg8[%c0_22, %c0_23, %c0_24, %c0_25], %44 {strides = array<i32>} : memref<1x8x24x64xbf16, #tpu.memory_space<vmem>>, vector<1x8x24x64xbf16>,
    %cst_26 = arith.constant 0.000000e+00 : bf16
    %45 = vector.broadcast %cst_26 : bf16 to vector<8x1x64xbf16>
    %c0_27 = arith.constant 0 : index
    %c0_28 = arith.constant 0 : index
    %c0_29 = arith.constant 0 : index
    %c0_30 = arith.constant 0 : index
    %46 = vector.load %arg8[%c0_27, %c0_28, %c0_29, %c0_30] : memref<1x8x24x64xbf16, #tpu.memory_space<vmem>>, vector<1x8x1x64xbf16>
    %47 = vector.shape_cast %46 : vector<1x8x1x64xbf16> to vector<8x1x64xbf16>
    %48 = vector.shape_cast %45 : vector<8x1x64xbf16> to vector<1x8x1x64xbf16>
    tpu.vector_store %arg8[%c0_27, %c0_28, %c0_29, %c0_30], %48 {strides = array<i32>} : memref<1x8x24x64xbf16, #tpu.memory_space<vmem>>, vector<1x8x1x64xbf16>,
    %cst_31 = arith.constant 0.000000e+00 : bf16
    %49 = vector.broadcast %cst_31 : bf16 to vector<8x7x64xbf16>
    %c0_32 = arith.constant 0 : index
    %c0_33 = arith.constant 0 : index
    %c17 = arith.constant 17 : index
    %c0_34 = arith.constant 0 : index
    %50 = vector.load %arg8[%c0_32, %c0_33, %c17, %c0_34] : memref<1x8x24x64xbf16, #tpu.memory_space<vmem>>, vector<1x8x7x64xbf16>
    %51 = vector.shape_cast %50 : vector<1x8x7x64xbf16> to vector<8x7x64xbf16>
    %52 = vector.shape_cast %49 : vector<8x7x64xbf16> to vector<1x8x7x64xbf16>
    tpu.vector_store %arg8[%c0_32, %c0_33, %c17, %c0_34], %52 {strides = array<i32>} : memref<1x8x24x64xbf16, #tpu.memory_space<vmem>>, vector<1x8x7x64xbf16>,
    return
  }
  func.func @transform_0(%arg0: i32, %arg1: i32) -> (i32, i32, i32, i32) {
    %c0_i32 = arith.constant 0 : i32
    %c0_i32_0 = arith.constant 0 : i32
    %c0_i32_1 = arith.constant 0 : i32
    return %arg0, %arg1, %c0_i32, %c0_i32_0 : i32, i32, i32, i32
  }
  func.func @transform_1(%arg0: i32, %arg1: i32) -> (i32, i32, i32, i32) {
    %c8_i32 = arith.constant 8 : i32
    %0 = arith.muli %arg1, %c8_i32 : i32
    %c1_i32 = arith.constant 1 : i32
    %1 = arith.subi %0, %c1_i32 : i32
    %c0_i32 = arith.constant 0 : i32
    %2 = arith.maxsi %1, %c0_i32 : i32
    %c0_i32_0 = arith.constant 0 : i32
    %c0_i32_1 = arith.constant 0 : i32
    %c0_i32_2 = arith.constant 0 : i32
    return %arg0, %2, %c0_i32_0, %c0_i32_1 : i32, i32, i32, i32
  }
  func.func @transform_2(%arg0: i32, %arg1: i32) -> (i32, i32, i32, i32) {
    %c1_i32 = arith.constant 1 : i32
    %0 = arith.addi %arg1, %c1_i32 : i32
    %c8_i32 = arith.constant 8 : i32
    %1 = arith.muli %0, %c8_i32 : i32
    %c15_i32 = arith.constant 15 : i32
    %2 = arith.minsi %1, %c15_i32 : i32
    %c0_i32 = arith.constant 0 : i32
    %c0_i32_0 = arith.constant 0 : i32
    %c0_i32_1 = arith.constant 0 : i32
    return %arg0, %2, %c0_i32, %c0_i32_0 : i32, i32, i32, i32
  }
  func.func @transform_3(%arg0: i32, %arg1: i32) -> (i32, i32) {
    %c0_i32 = arith.constant 0 : i32
    %c0_i32_0 = arith.constant 0 : i32
    %c0_i32_1 = arith.constant 0 : i32
    return %c0_i32, %c0_i32_0 : i32, i32
  }
  func.func @transform_4(%arg0: i32, %arg1: i32) -> (i32, i32) {
    %c0_i32 = arith.constant 0 : i32
    %c0_i32_0 = arith.constant 0 : i32
    %c0_i32_1 = arith.constant 0 : i32
    return %c0_i32, %c0_i32_0 : i32, i32
  }
  func.func @transform_5(%arg0: i32, %arg1: i32) -> (i32, i32) {
    %c0_i32 = arith.constant 0 : i32
    %c0_i32_0 = arith.constant 0 : i32
    %c0_i32_1 = arith.constant 0 : i32
    return %c0_i32, %c0_i32_0 : i32, i32
  }
  func.func @transform_6(%arg0: i32, %arg1: i32) -> (i32, i32, i32, i32) {
    %c0_i32 = arith.constant 0 : i32
    %c0_i32_0 = arith.constant 0 : i32
    %c0_i32_1 = arith.constant 0 : i32
    return %arg0, %arg1, %c0_i32, %c0_i32_0 : i32, i32, i32, i32
  }
}

</mosaic_0001>

<llo_original>
// kernel: tpu_custom_call.1
$region0: #{tpu_custom_call.1}
  #allocation0 [shape = 'u32[]', space=smem, size = 0x4, offset = 0x4, fixed_abs, tag = 'smem constant byte address 0x4 - core index']
  #allocation1 [shape = 'u32[144,128]{1,0:T(1,128)}', space=vmem, size = 0x12000, scoped, tag = 'internal scratch']
  #allocation2 [shape = 'bf16[192,12]{1,0:T(16,128)(2,1)}', space=vmem, size = 0xc000, scoped, tag = 'scratch operand']
  %s0 = inlined_call_operand.vmem [shape: bf16[2,16,24,4], index: 0, kind: input, shape index: {}]
  %s1 = inlined_call_operand.vmem [shape: bf16[2,16,24,4], index: 1, kind: input, shape index: {}]
  %s2 = inlined_call_operand.vmem [shape: bf16[2,16,24,4], index: 2, kind: input, shape index: {}]
  %s3 = inlined_call_operand.vmem [shape: bf16[12,192], index: 3, kind: input, shape index: {}]
  %s4 = inlined_call_operand.vmem [shape: f32[1,64], index: 4, kind: input, shape index: {}]
  %s5 = inlined_call_operand.vmem [shape: f32[1,64], index: 5, kind: input, shape index: {}]
  %s6 = inlined_call_operand.hbm [shape: bf16[2,16,24,64], index: 6, kind: output, shape index: {}]
  %s7 = sld [smem:[#allocation0]]
  $region73: #{tpu_custom_call.1} parent=0
    _
  %s9 = ssub.s32 1, %s7
  %s10 = scalar_select 0, %s9, %s7
  $region1: #{tpu_custom_call.1} parent=0
    #allocation3 [shape = 'u8[98304]{0}', space=vmem, size = 0x18000, scoped, tag = 'output window, operand 0']
    #allocation4 [shape = 's32[2]{0}', space=sflag, size = 0x8, scoped, tag = 'scoped memory for tpu_custom_call.1']
    %11 = vsyncpa [#allocation4], 0
    %s12 = scalar_lea.sflag [#allocation4], 1
    %13 = vsyncpa %s12, 0
    loop: start=0, step=1, limit=6
    $region2: #{tpu_custom_call.1} parent=1 // loop_pre_header
      _
    $region3: #{tpu_custom_call.1} parent=1 // loop_header
      %s15 = sphi 0, %s19
      %p16 = scmp.ge.s32.totalorder %s15, 6
      %s22 = sphi 0, %s34
      %s23 = sphi 0, %s30
      %s24 = sphi 0, %s22
      %s25 = sphi 0, %s23
      %s26 = sphi 0, %s24
      %s27 = sphi 0, %s25
      %s39 = sphi 0, %s41
      %s42 = sphi 0, %s39
      %s43 = sphi 0, %s42
      %s59 = sphi 0, %s43
      %s75 = sphi 0, %s77
      %s78 = sphi 0, %s75
      %s79 = sphi 0, %s78
      %s95 = sphi 0, %s79
      %s111 = sphi 0, %s113
      %s114 = sphi 0, %s111
      %s115 = sphi 0, %s114
      %s131 = sphi 0, %s115
      %s135 = sphi 0, %s135
      %s137 = sphi 0, %s135
      %s138 = sphi 0, %s137
      %s152 = sphi 0, %s138
      %s156 = sphi 0, %s156
      %s158 = sphi 0, %s156
      %s159 = sphi 0, %s158
      %s173 = sphi 0, %s159
      %s177 = sphi 0, %s177
      %s179 = sphi 0, %s177
      %s180 = sphi 0, %s179
      %s194 = sphi 0, %s180
      %s202 = sphi 0, %s204
      %s205 = sphi 0, %s202
      %s206 = sphi 0, %s205
      %s222 = sphi 0, %s206
    $region4: #{tpu_custom_call.1} parent=1 // loop_header_branch
      %18 = sbr.rel (%p16) target = $region8
    $region5: #{tpu_custom_call.1} parent=1 // loop_body
      %s20 = ssub.s32 %s15, 1
      %s21 = ssub.s32 %s15, 2
      %s28 = sadd.s32 1, %s23
      %p29 = scmp.ge.s32.totalorder %s28, 2
      %s30 = scalar_select %p29, 0, %s28
      %s31 = sadd.s32 1, %s22
      %s32 = scalar_select %p29, %s31, %s22
      %p33 = scmp.ge.s32.totalorder %s32, 2
      %s34 = scalar_select %p33, 0, %s32
      %s35 = ssub.s32 %s22, %s34
      %s36 = ssub.s32 %s23, %s30
      %s37 = sor.u32 %s35, %s36
      %p38 = scmp.eq.s32.totalorder %s37, 0
      %s40 = sadd.s32 %s39, 1
      %s41 = scalar_select %p38, %s39, %s40
      %p44 = pneg %p38
      %p45 = scmp.eq.s32.totalorder %s15, 3
      %p46 = por %p44, %p45
      %p47 = scmp.ne.s32.totalorder %s39, %s42
      %p48 = scmp.eq.s32.totalorder %s15, 0
      %p49 = por %p47, %p48
      %p50 = scmp.ne.s32.totalorder %s39, %s42
      %p51 = scmp.eq.s32.totalorder %s20, 3
      %p52 = por %p50, %p51
      %p53 = scmp.ne.s32.totalorder %s42, %s43
      %p54 = scmp.eq.s32.totalorder %s20, 0
      %p55 = por %p53, %p54
      %p56 = scmp.ne.s32.totalorder %s42, %s43
      %p57 = scmp.eq.s32.totalorder %s21, 3
      %p58 = por %p56, %p57
      %p60 = scmp.ne.s32.totalorder %s43, %s59
      %p61 = scmp.eq.s32.totalorder %s21, 0
      %p62 = por %p60, %p61
      %s63 = smul.u32 %s23, 8
      %s64 = ssub.s32 %s63, 1
      %p65 = scmp.gt.s32.totalorder %s64, 0
      %s66 = scalar_select %p65, %s64, 0
      %s67 = smul.u32 %s30, 8
      %s68 = ssub.s32 %s67, 1
      %p69 = scmp.gt.s32.totalorder %s68, 0
      %s70 = scalar_select %p69, %s68, 0
      %s71 = ssub.s32 %s22, %s34
      %s72 = ssub.s32 %s66, %s70
      %s73 = sor.u32 %s71, %s72
      %p74 = scmp.eq.s32.totalorder %s73, 0
      %s76 = sadd.s32 %s75, 1
      %s77 = scalar_select %p74, %s75, %s76
      %p80 = pneg %p74
      %p81 = scmp.eq.s32.totalorder %s15, 3
      %p82 = por %p80, %p81
      %p83 = scmp.ne.s32.totalorder %s75, %s78
      %p84 = scmp.eq.s32.totalorder %s15, 0
      %p85 = por %p83, %p84
      %p86 = scmp.ne.s32.totalorder %s75, %s78
      %p87 = scmp.eq.s32.totalorder %s20, 3
      %p88 = por %p86, %p87
      %p89 = scmp.ne.s32.totalorder %s78, %s79
      %p90 = scmp.eq.s32.totalorder %s20, 0
      %p91 = por %p89, %p90
      %p92 = scmp.ne.s32.totalorder %s78, %s79
      %p93 = scmp.eq.s32.totalorder %s21, 3
      %p94 = por %p92, %p93
      %p96 = scmp.ne.s32.totalorder %s79, %s95
      %p97 = scmp.eq.s32.totalorder %s21, 0
      %p98 = por %p96, %p97
      %s99 = sadd.s32 %s23, 1
      %s100 = smul.u32 %s99, 8
      %p101 = scmp.lt.s32.totalorder %s100, 15
      %s102 = scalar_select %p101, %s100, 15
      %s103 = sadd.s32 %s30, 1
      %s104 = smul.u32 %s103, 8
      %p105 = scmp.lt.s32.totalorder %s104, 15
      %s106 = scalar_select %p105, %s104, 15
      %s107 = ssub.s32 %s22, %s34
      %s108 = ssub.s32 %s102, %s106
      %s109 = sor.u32 %s107, %s108
      %p110 = scmp.eq.s32.totalorder %s109, 0
      %s112 = sadd.s32 %s111, 1
      %s113 = scalar_select %p110, %s111, %s112
      %p116 = pneg %p110
      %p117 = scmp.eq.s32.totalorder %s15, 3
      %p118 = por %p116, %p117
      %p119 = scmp.ne.s32.totalorder %s111, %s114
      %p120 = scmp.eq.s32.totalorder %s15, 0
      %p121 = por %p119, %p120
      %p122 = scmp.ne.s32.totalorder %s111, %s114
      %p123 = scmp.eq.s32.totalorder %s20, 3
      %p124 = por %p122, %p123
      %p125 = scmp.ne.s32.totalorder %s114, %s115
      %p126 = scmp.eq.s32.totalorder %s20, 0
      %p127 = por %p125, %p126
      %p128 = scmp.ne.s32.totalorder %s114, %s115
      %p129 = scmp.eq.s32.totalorder %s21, 3
      %p130 = por %p128, %p129
      %p132 = scmp.ne.s32.totalorder %s115, %s131
      %p133 = scmp.eq.s32.totalorder %s21, 0
      %p134 = por %p132, %p133
      %s136 = sadd.s32 %s135, 1
      %p139 = scmp.eq.s32.totalorder %s15, 3
      %p140 = scmp.ne.s32.totalorder %s135, %s137
      %p141 = scmp.eq.s32.totalorder %s15, 0
      %p142 = por %p140, %p141
      %p143 = scmp.ne.s32.totalorder %s135, %s137
      %p144 = scmp.eq.s32.totalorder %s20, 3
      %p145 = por %p143, %p144
      %p146 = scmp.ne.s32.totalorder %s137, %s138
      %p147 = scmp.eq.s32.totalorder %s20, 0
      %p148 = por %p146, %p147
      %p149 = scmp.ne.s32.totalorder %s137, %s138
      %p150 = scmp.eq.s32.totalorder %s21, 3
      %p151 = por %p149, %p150
      %p153 = scmp.ne.s32.totalorder %s138, %s152
      %p154 = scmp.eq.s32.totalorder %s21, 0
      %p155 = por %p153, %p154
      %s157 = sadd.s32 %s156, 1
      %p160 = scmp.eq.s32.totalorder %s15, 3
      %p161 = scmp.ne.s32.totalorder %s156, %s158
      %p162 = scmp.eq.s32.totalorder %s15, 0
      %p163 = por %p161, %p162
      %p164 = scmp.ne.s32.totalorder %s156, %s158
      %p165 = scmp.eq.s32.totalorder %s20, 3
      %p166 = por %p164, %p165
      %p167 = scmp.ne.s32.totalorder %s158, %s159
      %p168 = scmp.eq.s32.totalorder %s20, 0
      %p169 = por %p167, %p168
      %p170 = scmp.ne.s32.totalorder %s158, %s159
      %p171 = scmp.eq.s32.totalorder %s21, 3
      %p172 = por %p170, %p171
      %p174 = scmp.ne.s32.totalorder %s159, %s173
      %p175 = scmp.eq.s32.totalorder %s21, 0
      %p176 = por %p174, %p175
      %s178 = sadd.s32 %s177, 1
      %p181 = scmp.eq.s32.totalorder %s15, 3
      %p182 = scmp.ne.s32.totalorder %s177, %s179
      %p183 = scmp.eq.s32.totalorder %s15, 0
      %p184 = por %p182, %p183
      %p185 = scmp.ne.s32.totalorder %s177, %s179
      %p186 = scmp.eq.s32.totalorder %s20, 3
      %p187 = por %p185, %p186
      %p188 = scmp.ne.s32.totalorder %s179, %s180
      %p189 = scmp.eq.s32.totalorder %s20, 0
      %p190 = por %p188, %p189
      %p191 = scmp.ne.s32.totalorder %s179, %s180
      %p192 = scmp.eq.s32.totalorder %s21, 3
      %p193 = por %p191, %p192
      %p195 = scmp.ne.s32.totalorder %s180, %s194
      %p196 = scmp.eq.s32.totalorder %s21, 0
      %p197 = por %p195, %p196
      %s198 = ssub.s32 %s22, %s34
      %s199 = ssub.s32 %s23, %s30
      %s200 = sor.u32 %s198, %s199
      %p201 = scmp.eq.s32.totalorder %s200, 0
      %s203 = sadd.s32 %s202, 1
      %s204 = scalar_select %p201, %s202, %s203
      %p207 = pneg %p201
      %p208 = scmp.eq.s32.totalorder %s15, 3
      %p209 = por %p207, %p208
      %p210 = scmp.ne.s32.totalorder %s202, %s205
      %p211 = scmp.eq.s32.totalorder %s15, 0
      %p212 = por %p210, %p211
      %p213 = scmp.ne.s32.totalorder %s202, %s205
      %p214 = scmp.eq.s32.totalorder %s20, 3
      %p215 = por %p213, %p214
      %p216 = scmp.ne.s32.totalorder %s205, %s206
      %p217 = scmp.eq.s32.totalorder %s20, 0
      %p218 = por %p216, %p217
      %p219 = scmp.ne.s32.totalorder %s205, %s206
      %p220 = scmp.eq.s32.totalorder %s21, 3
      %p221 = por %p219, %p220
      %p223 = scmp.ne.s32.totalorder %s206, %s222
      %p224 = scmp.eq.s32.totalorder %s21, 0
      %p225 = por %p223, %p224
      %p226 = scmp.le.s32.totalorder 1, %s15
      %p227 = scmp.lt.s32.totalorder %s15, 5
      %p228 = pnand %p226, %p227
      %p229 = pneg %p228
      // Predicated region
      $region9: #{tpu_custom_call.1} parent=5 // pred_check
        _
      $region10: #{tpu_custom_call.1} parent=5 // pred_check_branch
        %231 = sbr.rel (%p228) target = $region12
      $region11: #{tpu_custom_call.1} parent=5 // pred_region
        %s232 = ssub.s32 %s15, 1
        // Predicated region
        $region13: #{tpu_custom_call.1} parent=11 // pred_check
          %p233 = pneg %p148
        $region14: #{tpu_custom_call.1} parent=11 // pred_check_branch
          %235 = sbr.rel (%p233) target = $region16
        $region15: #{tpu_custom_call.1} parent=11 // pred_region
          _
        $region16: #{tpu_custom_call.1} parent=11 // pred_fallthru
          _
        // Predicated region
        $region17: #{tpu_custom_call.1} parent=11 // pred_check
          %p236 = pneg %p169
        $region18: #{tpu_custom_call.1} parent=11 // pred_check_branch
          %238 = sbr.rel (%p236) target = $region20
        $region19: #{tpu_custom_call.1} parent=11 // pred_region
          _
        $region20: #{tpu_custom_call.1} parent=11 // pred_fallthru
          _
        // Predicated region
        $region21: #{tpu_custom_call.1} parent=11 // pred_check
          %p239 = pneg %p190
        $region22: #{tpu_custom_call.1} parent=11 // pred_check_branch
          %241 = sbr.rel (%p239) target = $region24
        $region23: #{tpu_custom_call.1} parent=11 // pred_region
          _
        $region24: #{tpu_custom_call.1} parent=11 // pred_fallthru
          _
      $region12: #{tpu_custom_call.1} parent=5 // pred_fallthru
        _
      %p242 = scmp.lt.s32.totalorder %s15, 4
      // Predicated region
      $region25: #{tpu_custom_call.1} parent=5 // pred_check
        %p243 = pneg %p242
      $region26: #{tpu_custom_call.1} parent=5 // pred_check_branch
        %245 = sbr.rel (%p243) target = $region28
      $region27: #{tpu_custom_call.1} parent=5 // pred_region
        // Predicated region
        $region29: #{tpu_custom_call.1} parent=27 // pred_check
          %p246 = pneg %p49
        $region30: #{tpu_custom_call.1} parent=27 // pred_check_branch
          %248 = sbr.rel (%p246) target = $region32
        $region31: #{tpu_custom_call.1} parent=27 // pred_region
          %s249 = smul.u32 8, %s23
          %p250 = scmp.lt.s32.totalorder %s22, 1
          %s251 = scalar_select %p250, %s22, 1
          %p252 = scmp.lt.s32.totalorder %s249, 15
          %s253 = scalar_select %p252, %s249, 15
          %s254 = smul.addr %s253, 3
          %s255 = smul.addr %s251, 48
          %s256 = sadd.s32 %s254, %s255
          %s257 = smul.addr %s256, 4
          %s258 = scalar_lea.vmem %s0, %s257
          %s259 = smul.u32 8, %s23
        $region32: #{tpu_custom_call.1} parent=27 // pred_fallthru
          _
        // Predicated region
        $region33: #{tpu_custom_call.1} parent=27 // pred_check
          %p260 = pneg %p85
        $region34: #{tpu_custom_call.1} parent=27 // pred_check_branch
          %262 = sbr.rel (%p260) target = $region36
        $region35: #{tpu_custom_call.1} parent=27 // pred_region
          %s263 = smul.u32 %s23, 8
          %s264 = ssub.s32 %s263, 1
          %p265 = scmp.gt.s32.totalorder %s264, 0
          %s266 = scalar_select %p265, %s264, 0
          %p267 = scmp.lt.s32.totalorder %s22, 1
          %s268 = scalar_select %p267, %s22, 1
          %p269 = scmp.lt.s32.totalorder %s266, 15
          %s270 = scalar_select %p269, %s266, 15
          %s271 = smul.addr %s270, 3
          %s272 = smul.addr %s268, 48
          %s273 = sadd.s32 %s271, %s272
          %s274 = smul.addr %s273, 4
          %s275 = scalar_lea.vmem %s1, %s274
          %s276 = smul.u32 %s23, 8
          %s277 = ssub.s32 %s276, 1
          %p278 = scmp.gt.s32.totalorder %s277, 0
          %s279 = scalar_select %p278, %s277, 0
        $region36: #{tpu_custom_call.1} parent=27 // pred_fallthru
          _
        // Predicated region
        $region37: #{tpu_custom_call.1} parent=27 // pred_check
          %p280 = pneg %p121
        $region38: #{tpu_custom_call.1} parent=27 // pred_check_branch
          %282 = sbr.rel (%p280) target = $region40
        $region39: #{tpu_custom_call.1} parent=27 // pred_region
          %s283 = sadd.s32 %s23, 1
          %s284 = smul.u32 %s283, 8
          %p285 = scmp.lt.s32.totalorder %s284, 15
          %s286 = scalar_select %p285, %s284, 15
          %p287 = scmp.lt.s32.totalorder %s22, 1
          %s288 = scalar_select %p287, %s22, 1
          %p289 = scmp.lt.s32.totalorder %s286, 15
          %s290 = scalar_select %p289, %s286, 15
          %s291 = smul.addr %s290, 3
          %s292 = smul.addr %s288, 48
          %s293 = sadd.s32 %s291, %s292
          %s294 = smul.addr %s293, 4
          %s295 = scalar_lea.vmem %s2, %s294
          %s296 = sadd.s32 %s23, 1
          %s297 = smul.u32 %s296, 8
          %p298 = scmp.lt.s32.totalorder %s297, 15
          %s299 = scalar_select %p298, %s297, 15
        $region40: #{tpu_custom_call.1} parent=27 // pred_fallthru
          _
      $region28: #{tpu_custom_call.1} parent=5 // pred_fallthru
        _
      %p300 = scmp.le.s32.totalorder 1, %s15
      %p301 = scmp.lt.s32.totalorder %s15, 5
      %p302 = pnand %p300, %p301
      %p303 = pneg %p302
      // Predicated region
      $region41: #{tpu_custom_call.1} parent=5 // pred_check
        _
      $region42: #{tpu_custom_call.1} parent=5 // pred_check_branch
        %305 = sbr.rel (%p302) target = $region44
      $region43: #{tpu_custom_call.1} parent=5 // pred_region
        %s306 = ssub.s32 %s15, 1
        %s307 = smul.u32 8, %s25
        %p308 = scmp.lt.s32.totalorder %s24, 1
        %s309 = scalar_select %p308, %s24, 1
        %p310 = scmp.lt.s32.totalorder %s307, 15
        %s311 = scalar_select %p310, %s307, 15
        %s312 = smul.addr %s311, 3
        %s313 = smul.addr %s309, 48
        %s314 = sadd.s32 %s312, %s313
        %s315 = smul.addr %s314, 4
        %s316 = scalar_lea.vmem %s0, %s315
        %p317 = pneg %p55
        %p318 = pneg %p52
        %s319 = smul.u32 %s25, 8
        %s320 = ssub.s32 %s319, 1
        %p321 = scmp.gt.s32.totalorder %s320, 0
        %s322 = scalar_select %p321, %s320, 0
        %p323 = scmp.lt.s32.totalorder %s24, 1
        %s324 = scalar_select %p323, %s24, 1
        %p325 = scmp.lt.s32.totalorder %s322, 15
        %s326 = scalar_select %p325, %s322, 15
        %s327 = smul.addr %s326, 3
        %s328 = smul.addr %s324, 48
        %s329 = sadd.s32 %s327, %s328
        %s330 = smul.addr %s329, 4
        %s331 = scalar_lea.vmem %s1, %s330
        %p332 = pneg %p91
        %p333 = pneg %p88
        %s334 = sadd.s32 %s25, 1
        %s335 = smul.u32 %s334, 8
        %p336 = scmp.lt.s32.totalorder %s335, 15
        %s337 = scalar_select %p336, %s335, 15
        %p338 = scmp.lt.s32.totalorder %s24, 1
        %s339 = scalar_select %p338, %s24, 1
        %p340 = scmp.lt.s32.totalorder %s337, 15
        %s341 = scalar_select %p340, %s337, 15
        %s342 = smul.addr %s341, 3
        %s343 = smul.addr %s339, 48
        %s344 = sadd.s32 %s342, %s343
        %s345 = smul.addr %s344, 4
        %s346 = scalar_lea.vmem %s2, %s345
        %p347 = pneg %p127
        %p348 = pneg %p124
        %p349 = pneg %p148
        %p350 = pneg %p145
        %p351 = pneg %p169
        %p352 = pneg %p166
        %p353 = pneg %p190
        %p354 = pneg %p187
        %p355 = pneg %p218
        %p356 = pneg %p215
        %s357 = sand.u32 %s205, 1
        %s358 = scalar_lea.sflag [#allocation4], %s357
        %s359 = sand.u32 %s205, 1
        %s360 = smul.addr %s359, 96
        %s361 = scalar_lea.vmem [#allocation3], %s360
        %s362 = smul.u32 8, %s25
        %p363 = scmp.lt.s32.totalorder %s24, 1
        %s364 = scalar_select %p363, %s24, 1
        %p365 = scmp.lt.s32.totalorder %s362, 15
        %s366 = scalar_select %p365, %s362, 15
        %s367 = smul.addr %s366, 3
        %s368 = smul.addr %s364, 48
        %s369 = sadd.s32 %s367, %s368
        %s370 = smul.addr %s369, 4
        %s371 = scalar_lea.vmem %s0, %s370
        %s372 = smul.u32 8, %s25
        %s373 = smul.u32 %s25, 8
        %s374 = ssub.s32 %s373, 1
        %p375 = scmp.gt.s32.totalorder %s374, 0
        %s376 = scalar_select %p375, %s374, 0
        %p377 = scmp.lt.s32.totalorder %s24, 1
        %s378 = scalar_select %p377, %s24, 1
        %p379 = scmp.lt.s32.totalorder %s376, 15
        %s380 = scalar_select %p379, %s376, 15
        %s381 = smul.addr %s380, 3
        %s382 = smul.addr %s378, 48
        %s383 = sadd.s32 %s381, %s382
        %s384 = smul.addr %s383, 4
        %s385 = scalar_lea.vmem %s1, %s384
        %s386 = smul.u32 %s25, 8
        %s387 = ssub.s32 %s386, 1
        %p388 = scmp.gt.s32.totalorder %s387, 0
        %s389 = scalar_select %p388, %s387, 0
        %s390 = sadd.s32 %s25, 1
        %s391 = smul.u32 %s390, 8
        %p392 = scmp.lt.s32.totalorder %s391, 15
        %s393 = scalar_select %p392, %s391, 15
        %p394 = scmp.lt.s32.totalorder %s24, 1
        %s395 = scalar_select %p394, %s24, 1
        %p396 = scmp.lt.s32.totalorder %s393, 15
        %s397 = scalar_select %p396, %s393, 15
        %s398 = smul.addr %s397, 3
        %s399 = smul.addr %s395, 48
        %s400 = sadd.s32 %s398, %s399
        %s401 = smul.addr %s400, 4
        %s402 = scalar_lea.vmem %s2, %s401
        %s403 = sadd.s32 %s25, 1
        %s404 = smul.u32 %s403, 8
        %p405 = scmp.lt.s32.totalorder %s404, 15
        %s406 = scalar_select %p405, %s404, 15
        %s407 = smul.u32 8, %s25
        %v409 = vld [vmem:[%s371] sm:$0xf]
        %v410 = vld [vmem:[%s371 + $0x4] sm:$0xf]
        %v411 = vld [vmem:[%s371 + $0x8] sm:$0xf]
        %v412 = vld [vmem:[%s371 + $0xc] sm:$0xf]
        %v413 = vld [vmem:[%s371 + $0x10] sm:$0xf]
        %v414 = vld [vmem:[%s371 + $0x14] sm:$0xf]
        %v415 = vld [vmem:[%s371 + $0x18] sm:$0xf]
        %v416 = vld [vmem:[%s371 + $0x1c] sm:$0xf]
        %v417 = vld [vmem:[%s371 + $0x20] sm:$0xf]
        %v418 = vld [vmem:[%s371 + $0x24] sm:$0xf]
        %v419 = vld [vmem:[%s371 + $0x28] sm:$0xf]
        %v420 = vld [vmem:[%s371 + $0x2c] sm:$0xf]
        %v421 = vld [vmem:[%s371 + $0x30] sm:$0xf]
        %v422 = vld [vmem:[%s371 + $0x34] sm:$0xf]
        %v423 = vld [vmem:[%s371 + $0x38] sm:$0xf]
        %v424 = vld [vmem:[%s371 + $0x3c] sm:$0xf]
        %v425 = vld [vmem:[%s371 + $0x40] sm:$0xf]
        %v426 = vld [vmem:[%s371 + $0x44] sm:$0xf]
        %v427 = vld [vmem:[%s371 + $0x48] sm:$0xf]
        %v428 = vld [vmem:[%s371 + $0x4c] sm:$0xf]
        %v429 = vld [vmem:[%s371 + $0x50] sm:$0xf]
        %v430 = vld [vmem:[%s371 + $0x54] sm:$0xf]
        %v431 = vld [vmem:[%s371 + $0x58] sm:$0xf]
        %v432 = vld [vmem:[%s371 + $0x5c] sm:$0xf]
        %v457 = vunpack.c.l.b16 %v409
        %v458 = vunpack.c.l.b16 %v410
        %v459 = vunpack.c.l.b16 %v411
        %v460 = vunpack.c.l.b16 %v412
        %v461 = vunpack.c.l.b16 %v413
        %v462 = vunpack.c.l.b16 %v414
        %v463 = vunpack.c.l.b16 %v415
        %v464 = vunpack.c.l.b16 %v416
        %v465 = vunpack.c.l.b16 %v417
        %v466 = vunpack.c.l.b16 %v418
        %v467 = vunpack.c.l.b16 %v419
        %v468 = vunpack.c.l.b16 %v420
        %v469 = vunpack.c.l.b16 %v421
        %v470 = vunpack.c.l.b16 %v422
        %v471 = vunpack.c.l.b16 %v423
        %v472 = vunpack.c.l.b16 %v424
        %v473 = vunpack.c.l.b16 %v425
        %v474 = vunpack.c.l.b16 %v426
        %v475 = vunpack.c.l.b16 %v427
        %v476 = vunpack.c.l.b16 %v428
        %v477 = vunpack.c.l.b16 %v429
        %v478 = vunpack.c.l.b16 %v430
        %v479 = vunpack.c.l.b16 %v431
        %v480 = vunpack.c.l.b16 %v432
        %v481 = vpack.c.b16 %v458, %v457
        %v482 = vpack.c.b16 %v460, %v459
        %v483 = vpack.c.b16 %v462, %v461
        %v484 = vpack.c.b16 %v464, %v463
        %v485 = vpack.c.b16 %v466, %v465
        %v486 = vpack.c.b16 %v468, %v467
        %v487 = vpack.c.b16 %v470, %v469
        %v488 = vpack.c.b16 %v472, %v471
        %v489 = vpack.c.b16 %v474, %v473
        %v490 = vpack.c.b16 %v476, %v475
        %v491 = vpack.c.b16 %v478, %v477
        %v492 = vpack.c.b16 %v480, %v479
        %493 = vrot.lane.b32.xlu0 %v481, 4
        %v494 = vpop.permute.xlu0 %493
        %495 = vrot.lane.b32.xlu0 %v482, 4
        %v496 = vpop.permute.xlu0 %495
        %497 = vrot.lane.b32.xlu0 %v483, 4
        %v498 = vpop.permute.xlu0 %497
        %499 = vrot.lane.b32.xlu0 %v484, 4
        %v500 = vpop.permute.xlu0 %499
        %501 = vrot.lane.b32.xlu0 %v485, 4
        %v502 = vpop.permute.xlu0 %501
        %503 = vrot.lane.b32.xlu0 %v486, 4
        %v504 = vpop.permute.xlu0 %503
        %505 = vrot.lane.b32.xlu0 %v487, 4
        %v506 = vpop.permute.xlu0 %505
        %507 = vrot.lane.b32.xlu0 %v488, 4
        %v508 = vpop.permute.xlu0 %507
        %509 = vrot.lane.b32.xlu0 %v489, 4
        %v510 = vpop.permute.xlu0 %509
        %511 = vrot.lane.b32.xlu0 %v490, 4
        %v512 = vpop.permute.xlu0 %511
        %513 = vrot.lane.b32.xlu0 %v491, 4
        %v514 = vpop.permute.xlu0 %513
        %515 = vrot.lane.b32.xlu0 %v492, 4
        %v516 = vpop.permute.xlu0 %515
        %vm529 = vcmask 64544
        %530 = vst.msk [vmem:[#allocation2] sm:$0xff] %vm529, %v494
        %531 = vst.msk [vmem:[#allocation2 + $0x8] sm:$0xff] %vm529, %v496
        %532 = vst.msk [vmem:[#allocation2 + $0x10] sm:$0xff] %vm529, %v498
        %533 = vst.msk [vmem:[#allocation2 + $0x18] sm:$0xff] %vm529, %v500
        %534 = vst.msk [vmem:[#allocation2 + $0x20] sm:$0xff] %vm529, %v502
        %535 = vst.msk [vmem:[#allocation2 + $0x28] sm:$0xff] %vm529, %v504
        %536 = vst.msk [vmem:[#allocation2 + $0x30] sm:$0xff] %vm529, %v506
        %537 = vst.msk [vmem:[#allocation2 + $0x38] sm:$0xff] %vm529, %v508
        %538 = vst.msk [vmem:[#allocation2 + $0x40] sm:$0xff] %vm529, %v510
        %539 = vst.msk [vmem:[#allocation2 + $0x48] sm:$0xff] %vm529, %v512
        %540 = vst.msk [vmem:[#allocation2 + $0x50] sm:$0xff] %vm529, %v514
        %541 = vst.msk [vmem:[#allocation2 + $0x58] sm:$0xff] %vm529, %v516
        %v542 = vpack.c.b16 %v457, %v457
        %v543 = vpack.c.b16 %v459, %v458
        %v544 = vpack.c.b16 %v461, %v460
        %v545 = vpack.c.b16 %v463, %v462
        %v546 = vpack.c.b16 %v465, %v464
        %v547 = vpack.c.b16 %v467, %v466
        %v548 = vpack.c.b16 %v469, %v468
        %v549 = vpack.c.b16 %v471, %v470
        %v550 = vpack.c.b16 %v473, %v472
        %v551 = vpack.c.b16 %v475, %v474
        %v552 = vpack.c.b16 %v477, %v476
        %vm564 = vcmask 31748
        %565 = vst.msk [vmem:[#allocation2 + $0x8] sm:$0xf0] %vm564, %v542
        %vm566 = vcmask 31744
        %567 = vst.msk [vmem:[#allocation2 + $0x10] sm:$0xff] %vm566, %v543
        %568 = vst.msk [vmem:[#allocation2 + $0x18] sm:$0xff] %vm566, %v544
        %569 = vst.msk [vmem:[#allocation2 + $0x20] sm:$0xff] %vm566, %v545
        %570 = vst.msk [vmem:[#allocation2 + $0x28] sm:$0xff] %vm566, %v546
        %571 = vst.msk [vmem:[#allocation2 + $0x30] sm:$0xff] %vm566, %v547
        %572 = vst.msk [vmem:[#allocation2 + $0x38] sm:$0xff] %vm566, %v548
        %573 = vst.msk [vmem:[#allocation2 + $0x40] sm:$0xff] %vm566, %v549
        %574 = vst.msk [vmem:[#allocation2 + $0x48] sm:$0xff] %vm566, %v550
        %575 = vst.msk [vmem:[#allocation2 + $0x50] sm:$0xff] %vm566, %v551
        %576 = vst.msk [vmem:[#allocation2 + $0x58] sm:$0xff] %vm566, %v552
        %v577 = vpack.c.b16 %v479, %v478
        %v578 = vpack.c.b16 %v480, %v480
        %579 = vrot.lane.b32.xlu0 %v544, 8
        %v580 = vpop.permute.xlu0 %579
        %581 = vrot.lane.b32.xlu0 %v545, 8
        %v582 = vpop.permute.xlu0 %581
        %583 = vrot.lane.b32.xlu0 %v546, 8
        %v584 = vpop.permute.xlu0 %583
        %585 = vrot.lane.b32.xlu0 %v547, 8
        %v586 = vpop.permute.xlu0 %585
        %587 = vrot.lane.b32.xlu0 %v548, 8
        %v588 = vpop.permute.xlu0 %587
        %589 = vrot.lane.b32.xlu0 %v549, 8
        %v590 = vpop.permute.xlu0 %589
        %591 = vrot.lane.b32.xlu0 %v550, 8
        %v592 = vpop.permute.xlu0 %591
        %593 = vrot.lane.b32.xlu0 %v551, 8
        %v594 = vpop.permute.xlu0 %593
        %595 = vrot.lane.b32.xlu0 %v552, 8
        %v596 = vpop.permute.xlu0 %595
        %597 = vrot.lane.b32.xlu0 %v577, 8
        %v598 = vpop.permute.xlu0 %597
        %599 = vrot.lane.b32.xlu0 %v578, 8
        %v600 = vpop.permute.xlu0 %599
        %vm612 = vcmask 97344
        %613 = vst.msk [vmem:[#allocation2] sm:$0xff] %vm612, %v580
        %614 = vst.msk [vmem:[#allocation2 + $0x8] sm:$0xff] %vm612, %v582
        %615 = vst.msk [vmem:[#allocation2 + $0x10] sm:$0xff] %vm612, %v584
        %616 = vst.msk [vmem:[#allocation2 + $0x18] sm:$0xff] %vm612, %v586
        %617 = vst.msk [vmem:[#allocation2 + $0x20] sm:$0xff] %vm612, %v588
        %618 = vst.msk [vmem:[#allocation2 + $0x28] sm:$0xff] %vm612, %v590
        %619 = vst.msk [vmem:[#allocation2 + $0x30] sm:$0xff] %vm612, %v592
        %620 = vst.msk [vmem:[#allocation2 + $0x38] sm:$0xff] %vm612, %v594
        %621 = vst.msk [vmem:[#allocation2 + $0x40] sm:$0xff] %vm612, %v596
        %622 = vst.msk [vmem:[#allocation2 + $0x48] sm:$0xff] %vm612, %v598
        %vm623 = vcmask 93248
        %624 = vst.msk [vmem:[#allocation2 + $0x50] sm:$0xf] %vm623, %v600
        %p625 = scmp.gt.s32.totalorder %s25, 0
        // Predicated region
        $region45: #{tpu_custom_call.1} parent=43 // pred_check
          %p626 = pneg %p625
        $region46: #{tpu_custom_call.1} parent=43 // pred_check_branch
          %628 = sbr.rel (%p626) target = $region48
        $region47: #{tpu_custom_call.1} parent=43 // pred_region
          %v629 = vld [vmem:[%s385] sm:$0xf]
          %v630 = vld [vmem:[%s385 + $0x4] sm:$0xf]
          %v631 = vld [vmem:[%s385 + $0x8] sm:$0xf]
          %v635 = vunpack.c.l.b16 %v629
          %v636 = vunpack.c.l.b16 %v630
          %v637 = vunpack.c.l.b16 %v631
          %v638 = vpack.c.b16 %v636, %v635
          %v639 = vpack.c.b16 %v637, %v637
          %642 = vst.msk [vmem:[#allocation2] sm:$0xff] %vm566, %v638
          %vm643 = vcmask 27648
          %644 = vst.msk [vmem:[#allocation2 + $0x8] sm:$0xf] %vm643, %v639
        $region48: #{tpu_custom_call.1} parent=43 // pred_fallthru
          _
        %p645 = scmp.eq.s32.totalorder %s25, 0
        // Predicated region
        $region49: #{tpu_custom_call.1} parent=43 // pred_check
          %p646 = pneg %p645
        $region50: #{tpu_custom_call.1} parent=43 // pred_check_branch
          %648 = sbr.rel (%p646) target = $region52
        $region51: #{tpu_custom_call.1} parent=43 // pred_region
          %649 = vst.msk [vmem:[#allocation2] sm:$0xff] %vm566, 0
          %vm650 = vcmask 27648
          %651 = vst.msk [vmem:[#allocation2 + $0x8] sm:$0xf] %vm650, 0
        $region52: #{tpu_custom_call.1} parent=43 // pred_fallthru
          _
        %p652 = scmp.lt.s32.totalorder %s25, 1
        // Predicated region
        $region53: #{tpu_custom_call.1} parent=43 // pred_check
          %p653 = pneg %p652
        $region54: #{tpu_custom_call.1} parent=43 // pred_check_branch
          %655 = sbr.rel (%p653) target = $region56
        $region55: #{tpu_custom_call.1} parent=43 // pred_region
          %v656 = vld [vmem:[%s402] sm:$0xf]
          %v657 = vld [vmem:[%s402 + $0x4] sm:$0xf]
          %v658 = vld [vmem:[%s402 + $0x8] sm:$0xf]
          %v662 = vunpack.c.l.b16 %v656
          %v663 = vunpack.c.l.b16 %v657
          %v664 = vunpack.c.l.b16 %v658
          %v665 = vpack.c.b16 %v662, %v662
          %v666 = vpack.c.b16 %v664, %v663
          %667 = vrot.lane.b32.xlu0 %v665, 8
          %v668 = vpop.permute.xlu0 %667
          %669 = vrot.lane.b32.xlu0 %v666, 8
          %v670 = vpop.permute.xlu0 %669
          %vm673 = vcmask 97348
          %674 = vst.msk [vmem:[#allocation2 + $0x50] sm:$0xf0] %vm673, %v668
          %675 = vst.msk [vmem:[#allocation2 + $0x58] sm:$0xff] %vm612, %v670
        $region56: #{tpu_custom_call.1} parent=43 // pred_fallthru
          _
        %p676 = scmp.eq.s32.totalorder %s25, 1
        // Predicated region
        $region57: #{tpu_custom_call.1} parent=43 // pred_check
          %p677 = pneg %p676
        $region58: #{tpu_custom_call.1} parent=43 // pred_check_branch
          %679 = sbr.rel (%p677) target = $region60
        $region59: #{tpu_custom_call.1} parent=43 // pred_region
          %vm680 = vcmask 97348
          %681 = vst.msk [vmem:[#allocation2 + $0x50] sm:$0xf0] %vm680, 0
          %682 = vst.msk [vmem:[#allocation2 + $0x58] sm:$0xff] %vm612, 0
        $region60: #{tpu_custom_call.1} parent=43 // pred_fallthru
          _
        %v683 = vld [vmem:[#allocation2] sm:$0xff]
        %v684 = vld [vmem:[#allocation2 + $0x8] sm:$0xff]
        %v685 = vld [vmem:[#allocation2 + $0x10] sm:$0xff]
        %v686 = vld [vmem:[#allocation2 + $0x18] sm:$0xff]
        %v687 = vld [vmem:[#allocation2 + $0x20] sm:$0xff]
        %v688 = vld [vmem:[#allocation2 + $0x28] sm:$0xff]
        %v689 = vld [vmem:[#allocation2 + $0x30] sm:$0xff]
        %v690 = vld [vmem:[#allocation2 + $0x38] sm:$0xff]
        %v691 = vld [vmem:[#allocation2 + $0x40] sm:$0xff]
        %v692 = vld [vmem:[#allocation2 + $0x48] sm:$0xff]
        %v693 = vld [vmem:[#allocation2 + $0x50] sm:$0xff]
        %v694 = vld [vmem:[#allocation2 + $0x58] sm:$0xff]
        %v695 = vld [vmem:[%s3] sm:$0xff]
        %v696 = vld [vmem:[%s3 + $0x8] sm:$0x33]
        %v699 = vunpack.c.l.b16 %v695
        %v700 = vunpack.c.h.b16 %v695
        %v701 = vunpack.c.l.b16 %v696
        %v702 = vunpack.c.h.b16 %v696
        %v703 = vpack.c.b16 %v701, %v699
        %v704 = vpack.c.b16 %v702, %v700
        %vm705 = vcmask 97280
        %v707 = vsel %vm705, %v683, 0
        %v710 = vsel %vm705, %v684, 0
        %v713 = vsel %vm705, %v685, 0
        %v716 = vsel %vm705, %v686, 0
        %v719 = vsel %vm705, %v687, 0
        %v722 = vsel %vm705, %v688, 0
        %v725 = vsel %vm705, %v689, 0
        %v728 = vsel %vm705, %v690, 0
        %v731 = vsel %vm705, %v691, 0
        %v734 = vsel %vm705, %v692, 0
        %v737 = vsel %vm705, %v693, 0
        %v740 = vsel %vm705, %v694, 0
        %vm742 = vcmask 1045504
        %v744 = vsel %vm742, %v703, 0
        %v747 = vsel %vm742, %v704, 0
        %749 = vmatprep.subr.bf16.mxu0 %v747
        %750 = vmatpush1.bf16.msra.mxu0 %v744
        %751 = vmatprep.subr.bf16.mxu0 0
        %752 = vmatpush1.bf16.msra.mxu0 0
        %753 = vmatprep.subr.bf16.mxu0 0
        %754 = vmatpush1.bf16.msra.mxu0 0
        %755 = vmatprep.subr.bf16.mxu0 0
        %756 = vmatpush1.bf16.msra.mxu0 0
        %757 = vmatprep.subr.bf16.mxu0 0
        %758 = vmatpush1.bf16.msra.mxu0 0
        %759 = vmatprep.subr.bf16.mxu0 0
        %760 = vmatpush1.bf16.msra.mxu0 0
        %761 = vmatprep.subr.bf16.mxu0 0
        %762 = vmatpush1.bf16.msra.mxu0 0
        %763 = vmatprep.subr.bf16.mxu0 0
        %764 = vmatpush1.bf16.msra.mxu0 0
        %765 = vmatprep.subr.bf16.mxu0 0
        %766 = vmatpush1.bf16.msra.mxu0 0
        %767 = vmatprep.subr.bf16.mxu0 0
        %768 = vmatpush1.bf16.msra.mxu0 0
        %769 = vmatprep.subr.bf16.mxu0 0
        %770 = vmatpush1.bf16.msra.mxu0 0
        %771 = vmatprep.subr.bf16.mxu0 0
        %772 = vmatpush1.bf16.msra.mxu0 0
        %773 = vmatprep.subr.bf16.mxu0 0
        %774 = vmatpush1.bf16.msra.mxu0 0
        %775 = vmatprep.subr.bf16.mxu0 0
        %776 = vmatpush1.bf16.msra.mxu0 0
        %777 = vmatprep.subr.bf16.mxu0 0
        %778 = vmatpush1.bf16.msra.mxu0 0
        %779 = vmatprep.subr.bf16.mxu0 0
        %780 = vmatpush1.bf16.msra.mxu0 0
        %781 = vmatprep.mubr.bf16.mxu0 0
        %782 = vmatmul.mubr.bf16.gmra.mrb[0].mxu0 %v707
        %v783 = vpop.f32.mrb[0].mxu0
        %v784 = vadd.f32 0.0, %v783
        %v785 = vpop.f32.mrb[0].mxu0
        %v786 = vadd.f32 0.0, %v785
        %v787 = vpop.f32.mrb[0].mxu0
        %v788 = vadd.f32 0.0, %v787
        %v789 = vpop.f32.mrb[0].mxu0
        %v790 = vadd.f32 0.0, %v789
        %791 = vmatprep.mubr.bf16.mxu0 0
        %792 = vmatmul.mubr.bf16.gmra.mrb[0].mxu0 %v710
        %v793 = vpop.f32.mrb[0].mxu0
        %v794 = vadd.f32 0.0, %v793
        %v795 = vpop.f32.mrb[0].mxu0
        %v796 = vadd.f32 0.0, %v795
        %v797 = vpop.f32.mrb[0].mxu0
        %v798 = vadd.f32 0.0, %v797
        %v799 = vpop.f32.mrb[0].mxu0
        %v800 = vadd.f32 0.0, %v799
        %801 = vmatprep.mubr.bf16.mxu0 0
        %802 = vmatmul.mubr.bf16.gmra.mrb[0].mxu0 %v713
        %v803 = vpop.f32.mrb[0].mxu0
        %v804 = vadd.f32 0.0, %v803
        %v805 = vpop.f32.mrb[0].mxu0
        %v806 = vadd.f32 0.0, %v805
        %v807 = vpop.f32.mrb[0].mxu0
        %v808 = vadd.f32 0.0, %v807
        %v809 = vpop.f32.mrb[0].mxu0
        %v810 = vadd.f32 0.0, %v809
        %811 = vmatprep.mubr.bf16.mxu0 0
        %812 = vmatmul.mubr.bf16.gmra.mrb[0].mxu0 %v716
        %v813 = vpop.f32.mrb[0].mxu0
        %v814 = vadd.f32 0.0, %v813
        %v815 = vpop.f32.mrb[0].mxu0
        %v816 = vadd.f32 0.0, %v815
        %v817 = vpop.f32.mrb[0].mxu0
        %v818 = vadd.f32 0.0, %v817
        %v819 = vpop.f32.mrb[0].mxu0
        %v820 = vadd.f32 0.0, %v819
        %821 = vmatprep.mubr.bf16.mxu0 0
        %822 = vmatmul.mubr.bf16.gmra.mrb[0].mxu0 %v719
        %v823 = vpop.f32.mrb[0].mxu0
        %v824 = vadd.f32 0.0, %v823
        %v825 = vpop.f32.mrb[0].mxu0
        %v826 = vadd.f32 0.0, %v825
        %v827 = vpop.f32.mrb[0].mxu0
        %v828 = vadd.f32 0.0, %v827
        %v829 = vpop.f32.mrb[0].mxu0
        %v830 = vadd.f32 0.0, %v829
        %831 = vmatprep.mubr.bf16.mxu0 0
        %832 = vmatmul.mubr.bf16.gmra.mrb[0].mxu0 %v722
        %v833 = vpop.f32.mrb[0].mxu0
        %v834 = vadd.f32 0.0, %v833
        %v835 = vpop.f32.mrb[0].mxu0
        %v836 = vadd.f32 0.0, %v835
        %v837 = vpop.f32.mrb[0].mxu0
        %v838 = vadd.f32 0.0, %v837
        %v839 = vpop.f32.mrb[0].mxu0
        %v840 = vadd.f32 0.0, %v839
        %841 = vmatprep.mubr.bf16.mxu0 0
        %842 = vmatmul.mubr.bf16.gmra.mrb[0].mxu0 %v725
        %v843 = vpop.f32.mrb[0].mxu0
        %v844 = vadd.f32 0.0, %v843
        %v845 = vpop.f32.mrb[0].mxu0
        %v846 = vadd.f32 0.0, %v845
        %v847 = vpop.f32.mrb[0].mxu0
        %v848 = vadd.f32 0.0, %v847
        %v849 = vpop.f32.mrb[0].mxu0
        %v850 = vadd.f32 0.0, %v849
        %851 = vmatprep.mubr.bf16.mxu0 0
        %852 = vmatmul.mubr.bf16.gmra.mrb[0].mxu0 %v728
        %v853 = vpop.f32.mrb[0].mxu0
        %v854 = vadd.f32 0.0, %v853
        %v855 = vpop.f32.mrb[0].mxu0
        %v856 = vadd.f32 0.0, %v855
        %v857 = vpop.f32.mrb[0].mxu0
        %v858 = vadd.f32 0.0, %v857
        %v859 = vpop.f32.mrb[0].mxu0
        %v860 = vadd.f32 0.0, %v859
        %861 = vmatprep.mubr.bf16.mxu0 0
        %862 = vmatmul.mubr.bf16.gmra.mrb[0].mxu0 %v731
        %v863 = vpop.f32.mrb[0].mxu0
        %v864 = vadd.f32 0.0, %v863
        %v865 = vpop.f32.mrb[0].mxu0
        %v866 = vadd.f32 0.0, %v865
        %v867 = vpop.f32.mrb[0].mxu0
        %v868 = vadd.f32 0.0, %v867
        %v869 = vpop.f32.mrb[0].mxu0
        %v870 = vadd.f32 0.0, %v869
        %871 = vmatprep.mubr.bf16.mxu0 0
        %872 = vmatmul.mubr.bf16.gmra.mrb[0].mxu0 %v734
        %v873 = vpop.f32.mrb[0].mxu0
        %v874 = vadd.f32 0.0, %v873
        %v875 = vpop.f32.mrb[0].mxu0
        %v876 = vadd.f32 0.0, %v875
        %v877 = vpop.f32.mrb[0].mxu0
        %v878 = vadd.f32 0.0, %v877
        %v879 = vpop.f32.mrb[0].mxu0
        %v880 = vadd.f32 0.0, %v879
        %881 = vmatprep.mubr.bf16.mxu0 0
        %882 = vmatmul.mubr.bf16.gmra.mrb[0].mxu0 %v737
        %v883 = vpop.f32.mrb[0].mxu0
        %v884 = vadd.f32 0.0, %v883
        %v885 = vpop.f32.mrb[0].mxu0
        %v886 = vadd.f32 0.0, %v885
        %v887 = vpop.f32.mrb[0].mxu0
        %v888 = vadd.f32 0.0, %v887
        %v889 = vpop.f32.mrb[0].mxu0
        %v890 = vadd.f32 0.0, %v889
        %891 = vmatprep.mubr.bf16.mxu0 0
        %892 = vmatmul.mubr.bf16.gmra.mrb[0].mxu0 %v740
        %v893 = vpop.f32.mrb[0].mxu0
        %v894 = vadd.f32 0.0, %v893
        %v895 = vpop.f32.mrb[0].mxu0
        %v896 = vadd.f32 0.0, %v895
        %v897 = vpop.f32.mrb[0].mxu0
        %v898 = vadd.f32 0.0, %v897
        %v899 = vpop.f32.mrb[0].mxu0
        %v900 = vadd.f32 0.0, %v899
        %901 = vdwg.mxu0
        %v902 = vrot.slane %v784, 7
        %v903 = vrot.slane %v788, 7
        %v904 = vrot.slane %v794, 7
        %v905 = vrot.slane %v798, 7
        %v906 = vrot.slane %v804, 7
        %v907 = vrot.slane %v808, 7
        %v908 = vrot.slane %v814, 7
        %v909 = vrot.slane %v818, 7
        %v910 = vrot.slane %v824, 7
        %v911 = vrot.slane %v828, 7
        %v912 = vrot.slane %v834, 7
        %v913 = vrot.slane %v838, 7
        %v914 = vrot.slane %v844, 7
        %v915 = vrot.slane %v848, 7
        %v916 = vrot.slane %v854, 7
        %v917 = vrot.slane %v858, 7
        %v918 = vrot.slane %v864, 7
        %v919 = vrot.slane %v868, 7
        %v920 = vrot.slane %v874, 7
        %v921 = vrot.slane %v878, 7
        %v922 = vrot.slane %v884, 7
        %v923 = vrot.slane %v888, 7
        %v924 = vrot.slane %v894, 7
        %v925 = vrot.slane %v898, 7
        %v926 = vlaneseq
        %v927 = vshrl.u32 %v926, 7
        %vm928 = vcmp.lt.s32.totalorder %v927, 1
        %v929 = vsel %vm928, %v924, %v925
        %v930 = vsel %vm928, %v923, %v924
        %v931 = vsel %vm928, %v922, %v923
        %v932 = vsel %vm928, %v921, %v922
        %v933 = vsel %vm928, %v920, %v921
        %v934 = vsel %vm928, %v919, %v920
        %v935 = vsel %vm928, %v918, %v919
        %v936 = vsel %vm928, %v917, %v918
        %v937 = vsel %vm928, %v916, %v917
        %v938 = vsel %vm928, %v915, %v916
        %v939 = vsel %vm928, %v914, %v915
        %v940 = vsel %vm928, %v913, %v914
        %v941 = vsel %vm928, %v912, %v913
        %v942 = vsel %vm928, %v911, %v912
        %v943 = vsel %vm928, %v910, %v911
        %v944 = vsel %vm928, %v909, %v910
        %v945 = vsel %vm928, %v908, %v909
        %v946 = vsel %vm928, %v907, %v908
        %v947 = vsel %vm928, %v906, %v907
        %v948 = vsel %vm928, %v905, %v906
        %v949 = vsel %vm928, %v904, %v905
        %v950 = vsel %vm928, %v903, %v904
        %v951 = vsel %vm928, %v902, %v903
        %v952 = vsel %vm928, %v925, %v902
        %977 = vrot.lane.b32.xlu0 %v952, 64
        %v978 = vpop.permute.xlu0 %977
        %979 = vrot.lane.b32.xlu0 %v951, 64
        %v980 = vpop.permute.xlu0 %979
        %981 = vrot.lane.b32.xlu0 %v950, 64
        %v982 = vpop.permute.xlu0 %981
        %983 = vrot.lane.b32.xlu0 %v949, 64
        %v984 = vpop.permute.xlu0 %983
        %985 = vrot.lane.b32.xlu0 %v948, 64
        %v986 = vpop.permute.xlu0 %985
        %987 = vrot.lane.b32.xlu0 %v947, 64
        %v988 = vpop.permute.xlu0 %987
        %989 = vrot.lane.b32.xlu0 %v946, 64
        %v990 = vpop.permute.xlu0 %989
        %991 = vrot.lane.b32.xlu0 %v945, 64
        %v992 = vpop.permute.xlu0 %991
        %993 = vrot.lane.b32.xlu0 %v944, 64
        %v994 = vpop.permute.xlu0 %993
        %995 = vrot.lane.b32.xlu0 %v943, 64
        %v996 = vpop.permute.xlu0 %995
        %997 = vrot.lane.b32.xlu0 %v942, 64
        %v998 = vpop.permute.xlu0 %997
        %999 = vrot.lane.b32.xlu0 %v941, 64
        %v1000 = vpop.permute.xlu0 %999
        %1001 = vrot.lane.b32.xlu0 %v940, 64
        %v1002 = vpop.permute.xlu0 %1001
        %1003 = vrot.lane.b32.xlu0 %v939, 64
        %v1004 = vpop.permute.xlu0 %1003
        %1005 = vrot.lane.b32.xlu0 %v938, 64
        %v1006 = vpop.permute.xlu0 %1005
        %1007 = vrot.lane.b32.xlu0 %v937, 64
        %v1008 = vpop.permute.xlu0 %1007
        %1009 = vrot.lane.b32.xlu0 %v936, 64
        %v1010 = vpop.permute.xlu0 %1009
        %1011 = vrot.lane.b32.xlu0 %v935, 64
        %v1012 = vpop.permute.xlu0 %1011
        %1013 = vrot.lane.b32.xlu0 %v934, 64
        %v1014 = vpop.permute.xlu0 %1013
        %1015 = vrot.lane.b32.xlu0 %v933, 64
        %v1016 = vpop.permute.xlu0 %1015
        %1017 = vrot.lane.b32.xlu0 %v932, 64
        %v1018 = vpop.permute.xlu0 %1017
        %1019 = vrot.lane.b32.xlu0 %v931, 64
        %v1020 = vpop.permute.xlu0 %1019
        %1021 = vrot.lane.b32.xlu0 %v930, 64
        %v1022 = vpop.permute.xlu0 %1021
        %1023 = vrot.lane.b32.xlu0 %v929, 64
        %v1024 = vpop.permute.xlu0 %1023
        %v1049 = vadd.f32 %v784, %v978
        %v1050 = vadd.f32 %v788, %v980
        %v1051 = vadd.f32 %v794, %v982
        %v1052 = vadd.f32 %v798, %v984
        %v1053 = vadd.f32 %v804, %v986
        %v1054 = vadd.f32 %v808, %v988
        %v1055 = vadd.f32 %v814, %v990
        %v1056 = vadd.f32 %v818, %v992
        %v1057 = vadd.f32 %v824, %v994
        %v1058 = vadd.f32 %v828, %v996
        %v1059 = vadd.f32 %v834, %v998
        %v1060 = vadd.f32 %v838, %v1000
        %v1061 = vadd.f32 %v844, %v1002
        %v1062 = vadd.f32 %v848, %v1004
        %v1063 = vadd.f32 %v854, %v1006
        %v1064 = vadd.f32 %v858, %v1008
        %v1065 = vadd.f32 %v864, %v1010
        %v1066 = vadd.f32 %v868, %v1012
        %v1067 = vadd.f32 %v874, %v1014
        %v1068 = vadd.f32 %v878, %v1016
        %v1069 = vadd.f32 %v884, %v1018
        %v1070 = vadd.f32 %v888, %v1020
        %v1071 = vadd.f32 %v894, %v1022
        %v1072 = vadd.f32 %v898, %v1024
        %v1073 = vrot.slane %v786, 1
        %v1074 = vrot.slane %v790, 1
        %v1075 = vrot.slane %v796, 1
        %v1076 = vrot.slane %v800, 1
        %v1077 = vrot.slane %v806, 1
        %v1078 = vrot.slane %v810, 1
        %v1079 = vrot.slane %v816, 1
        %v1080 = vrot.slane %v820, 1
        %v1081 = vrot.slane %v826, 1
        %v1082 = vrot.slane %v830, 1
        %v1083 = vrot.slane %v836, 1
        %v1084 = vrot.slane %v840, 1
        %v1085 = vrot.slane %v846, 1
        %v1086 = vrot.slane %v850, 1
        %v1087 = vrot.slane %v856, 1
        %v1088 = vrot.slane %v860, 1
        %v1089 = vrot.slane %v866, 1
        %v1090 = vrot.slane %v870, 1
        %v1091 = vrot.slane %v876, 1
        %v1092 = vrot.slane %v880, 1
        %v1093 = vrot.slane %v886, 1
        %v1094 = vrot.slane %v890, 1
        %v1095 = vrot.slane %v896, 1
        %v1096 = vrot.slane %v900, 1
        %vm1097 = vcmp.lt.s32.totalorder %v927, 7
        %v1098 = vsel %vm1097, %v1095, %v1096
        %v1099 = vsel %vm1097, %v1094, %v1095
        %v1100 = vsel %vm1097, %v1093, %v1094
        %v1101 = vsel %vm1097, %v1092, %v1093
        %v1102 = vsel %vm1097, %v1091, %v1092
        %v1103 = vsel %vm1097, %v1090, %v1091
        %v1104 = vsel %vm1097, %v1089, %v1090
        %v1105 = vsel %vm1097, %v1088, %v1089
        %v1106 = vsel %vm1097, %v1087, %v1088
        %v1107 = vsel %vm1097, %v1086, %v1087
        %v1108 = vsel %vm1097, %v1085, %v1086
        %v1109 = vsel %vm1097, %v1084, %v1085
        %v1110 = vsel %vm1097, %v1083, %v1084
        %v1111 = vsel %vm1097, %v1082, %v1083
        %v1112 = vsel %vm1097, %v1081, %v1082
        %v1113 = vsel %vm1097, %v1080, %v1081
        %v1114 = vsel %vm1097, %v1079, %v1080
        %v1115 = vsel %vm1097, %v1078, %v1079
        %v1116 = vsel %vm1097, %v1077, %v1078
        %v1117 = vsel %vm1097, %v1076, %v1077
        %v1118 = vsel %vm1097, %v1075, %v1076
        %v1119 = vsel %vm1097, %v1074, %v1075
        %v1120 = vsel %vm1097, %v1073, %v1074
        %v1121 = vsel %vm1097, %v1096, %v1073
        %1146 = vrot.lane.b32.xlu0 %v1120, 64
        %v1147 = vpop.permute.xlu0 %1146
        %1148 = vrot.lane.b32.xlu0 %v1119, 64
        %v1149 = vpop.permute.xlu0 %1148
        %1150 = vrot.lane.b32.xlu0 %v1118, 64
        %v1151 = vpop.permute.xlu0 %1150
        %1152 = vrot.lane.b32.xlu0 %v1117, 64
        %v1153 = vpop.permute.xlu0 %1152
        %1154 = vrot.lane.b32.xlu0 %v1116, 64
        %v1155 = vpop.permute.xlu0 %1154
        %1156 = vrot.lane.b32.xlu0 %v1115, 64
        %v1157 = vpop.permute.xlu0 %1156
        %1158 = vrot.lane.b32.xlu0 %v1114, 64
        %v1159 = vpop.permute.xlu0 %1158
        %1160 = vrot.lane.b32.xlu0 %v1113, 64
        %v1161 = vpop.permute.xlu0 %1160
        %1162 = vrot.lane.b32.xlu0 %v1112, 64
        %v1163 = vpop.permute.xlu0 %1162
        %1164 = vrot.lane.b32.xlu0 %v1111, 64
        %v1165 = vpop.permute.xlu0 %1164
        %1166 = vrot.lane.b32.xlu0 %v1110, 64
        %v1167 = vpop.permute.xlu0 %1166
        %1168 = vrot.lane.b32.xlu0 %v1109, 64
        %v1169 = vpop.permute.xlu0 %1168
        %1170 = vrot.lane.b32.xlu0 %v1108, 64
        %v1171 = vpop.permute.xlu0 %1170
        %1172 = vrot.lane.b32.xlu0 %v1107, 64
        %v1173 = vpop.permute.xlu0 %1172
        %1174 = vrot.lane.b32.xlu0 %v1106, 64
        %v1175 = vpop.permute.xlu0 %1174
        %1176 = vrot.lane.b32.xlu0 %v1105, 64
        %v1177 = vpop.permute.xlu0 %1176
        %1178 = vrot.lane.b32.xlu0 %v1104, 64
        %v1179 = vpop.permute.xlu0 %1178
        %1180 = vrot.lane.b32.xlu0 %v1103, 64
        %v1181 = vpop.permute.xlu0 %1180
        %1182 = vrot.lane.b32.xlu0 %v1102, 64
        %v1183 = vpop.permute.xlu0 %1182
        %1184 = vrot.lane.b32.xlu0 %v1101, 64
        %v1185 = vpop.permute.xlu0 %1184
        %1186 = vrot.lane.b32.xlu0 %v1100, 64
        %v1187 = vpop.permute.xlu0 %1186
        %1188 = vrot.lane.b32.xlu0 %v1099, 64
        %v1189 = vpop.permute.xlu0 %1188
        %1190 = vrot.lane.b32.xlu0 %v1098, 64
        %v1191 = vpop.permute.xlu0 %1190
        %1192 = vrot.lane.b32.xlu0 %v1121, 64
        %v1193 = vpop.permute.xlu0 %1192
        %v1218 = vadd.f32 %v1049, %v1147
        %v1219 = vadd.f32 %v1050, %v1149
        %v1220 = vadd.f32 %v1051, %v1151
        %v1221 = vadd.f32 %v1052, %v1153
        %v1222 = vadd.f32 %v1053, %v1155
        %v1223 = vadd.f32 %v1054, %v1157
        %v1224 = vadd.f32 %v1055, %v1159
        %v1225 = vadd.f32 %v1056, %v1161
        %v1226 = vadd.f32 %v1057, %v1163
        %v1227 = vadd.f32 %v1058, %v1165
        %v1228 = vadd.f32 %v1059, %v1167
        %v1229 = vadd.f32 %v1060, %v1169
        %v1230 = vadd.f32 %v1061, %v1171
        %v1231 = vadd.f32 %v1062, %v1173
        %v1232 = vadd.f32 %v1063, %v1175
        %v1233 = vadd.f32 %v1064, %v1177
        %v1234 = vadd.f32 %v1065, %v1179
        %v1235 = vadd.f32 %v1066, %v1181
        %v1236 = vadd.f32 %v1067, %v1183
        %v1237 = vadd.f32 %v1068, %v1185
        %v1238 = vadd.f32 %v1069, %v1187
        %v1239 = vadd.f32 %v1070, %v1189
        %v1240 = vadd.f32 %v1071, %v1191
        %v1241 = vadd.f32 %v1072, %v1193
        %v1242 = vld [vmem:[%s4] sm:$0x1]
        %v1244 = vlaneseq
        %v1245 = vshrl.u32 %v1244, 7
        %v1246 = vsub.s32 0, %v1245
        %v1247 = vrot.slane %v1242, %v1246
        %1248 = vrot.lane.b32.xlu0 %v1247, 64
        %v1249 = vpop.permute.xlu0 %1248
        %v1251 = vmul.f32 %v1218, %v1249
        %v1252 = vmul.f32 %v1219, %v1249
        %v1253 = vmul.f32 %v1220, %v1249
        %v1254 = vmul.f32 %v1221, %v1249
        %v1255 = vmul.f32 %v1222, %v1249
        %v1256 = vmul.f32 %v1223, %v1249
        %v1257 = vmul.f32 %v1224, %v1249
        %v1258 = vmul.f32 %v1225, %v1249
        %v1259 = vmul.f32 %v1226, %v1249
        %v1260 = vmul.f32 %v1227, %v1249
        %v1261 = vmul.f32 %v1228, %v1249
        %v1262 = vmul.f32 %v1229, %v1249
        %v1263 = vmul.f32 %v1230, %v1249
        %v1264 = vmul.f32 %v1231, %v1249
        %v1265 = vmul.f32 %v1232, %v1249
        %v1266 = vmul.f32 %v1233, %v1249
        %v1267 = vmul.f32 %v1234, %v1249
        %v1268 = vmul.f32 %v1235, %v1249
        %v1269 = vmul.f32 %v1236, %v1249
        %v1270 = vmul.f32 %v1237, %v1249
        %v1271 = vmul.f32 %v1238, %v1249
        %v1272 = vmul.f32 %v1239, %v1249
        %v1273 = vmul.f32 %v1240, %v1249
        %v1274 = vmul.f32 %v1241, %v1249
        %v1275 = vld [vmem:[%s5] sm:$0x1]
        %v1277 = vlaneseq
        %v1278 = vshrl.u32 %v1277, 7
        %v1279 = vsub.s32 0, %v1278
        %v1280 = vrot.slane %v1275, %v1279
        %1281 = vrot.lane.b32.xlu0 %v1280, 64
        %v1282 = vpop.permute.xlu0 %1281
        %v1284 = vadd.f32 %v1251, %v1282
        %v1285 = vadd.f32 %v1252, %v1282
        %v1286 = vadd.f32 %v1253, %v1282
        %v1287 = vadd.f32 %v1254, %v1282
        %v1288 = vadd.f32 %v1255, %v1282
        %v1289 = vadd.f32 %v1256, %v1282
        %v1290 = vadd.f32 %v1257, %v1282
        %v1291 = vadd.f32 %v1258, %v1282
        %v1292 = vadd.f32 %v1259, %v1282
        %v1293 = vadd.f32 %v1260, %v1282
        %v1294 = vadd.f32 %v1261, %v1282
        %v1295 = vadd.f32 %v1262, %v1282
        %v1296 = vadd.f32 %v1263, %v1282
        %v1297 = vadd.f32 %v1264, %v1282
        %v1298 = vadd.f32 %v1265, %v1282
        %v1299 = vadd.f32 %v1266, %v1282
        %v1300 = vadd.f32 %v1267, %v1282
        %v1301 = vadd.f32 %v1268, %v1282
        %v1302 = vadd.f32 %v1269, %v1282
        %v1303 = vadd.f32 %v1270, %v1282
        %v1304 = vadd.f32 %v1271, %v1282
        %v1305 = vadd.f32 %v1272, %v1282
        %v1306 = vadd.f32 %v1273, %v1282
        %v1307 = vadd.f32 %v1274, %v1282
        %v1308 = vmax.f32 %v1284, 0.0
        %v1309 = vmax.f32 %v1285, 0.0
        %v1310 = vmax.f32 %v1286, 0.0
        %v1311 = vmax.f32 %v1287, 0.0
        %v1312 = vmax.f32 %v1288, 0.0
        %v1313 = vmax.f32 %v1289, 0.0
        %v1314 = vmax.f32 %v1290, 0.0
        %v1315 = vmax.f32 %v1291, 0.0
        %v1316 = vmax.f32 %v1292, 0.0
        %v1317 = vmax.f32 %v1293, 0.0
        %v1318 = vmax.f32 %v1294, 0.0
        %v1319 = vmax.f32 %v1295, 0.0
        %v1320 = vmax.f32 %v1296, 0.0
        %v1321 = vmax.f32 %v1297, 0.0
        %v1322 = vmax.f32 %v1298, 0.0
        %v1323 = vmax.f32 %v1299, 0.0
        %v1324 = vmax.f32 %v1300, 0.0
        %v1325 = vmax.f32 %v1301, 0.0
        %v1326 = vmax.f32 %v1302, 0.0
        %v1327 = vmax.f32 %v1303, 0.0
        %v1328 = vmax.f32 %v1304, 0.0
        %v1329 = vmax.f32 %v1305, 0.0
        %v1330 = vmax.f32 %v1306, 0.0
        %v1331 = vmax.f32 %v1307, 0.0
        %v1332 = vpack.c.bf16 %v1309, %v1308
        %v1333 = vpack.c.bf16 %v1310, %v1310
        %v1334 = vpack.c.bf16 %v1312, %v1311
        %v1335 = vpack.c.bf16 %v1313, %v1313
        %v1336 = vpack.c.bf16 %v1315, %v1314
        %v1337 = vpack.c.bf16 %v1316, %v1316
        %v1338 = vpack.c.bf16 %v1318, %v1317
        %v1339 = vpack.c.bf16 %v1319, %v1319
        %v1340 = vpack.c.bf16 %v1321, %v1320
        %v1341 = vpack.c.bf16 %v1322, %v1322
        %v1342 = vpack.c.bf16 %v1324, %v1323
        %v1343 = vpack.c.bf16 %v1325, %v1325
        %v1344 = vpack.c.bf16 %v1327, %v1326
        %v1345 = vpack.c.bf16 %v1328, %v1328
        %v1346 = vpack.c.bf16 %v1330, %v1329
        %v1347 = vpack.c.bf16 %v1331, %v1331
        %v1364 = vunpack.c.l.b16 %v1332
        %v1365 = vunpack.c.h.b16 %v1332
        %v1366 = vunpack.c.l.b16 %v1333
        %v1367 = vunpack.c.l.b16 %v1334
        %v1368 = vunpack.c.h.b16 %v1334
        %v1369 = vunpack.c.l.b16 %v1335
        %v1370 = vunpack.c.l.b16 %v1336
        %v1371 = vunpack.c.h.b16 %v1336
        %v1372 = vunpack.c.l.b16 %v1337
        %v1373 = vunpack.c.l.b16 %v1338
        %v1374 = vunpack.c.h.b16 %v1338
        %v1375 = vunpack.c.l.b16 %v1339
        %v1376 = vunpack.c.l.b16 %v1340
        %v1377 = vunpack.c.h.b16 %v1340
        %v1378 = vunpack.c.l.b16 %v1341
        %v1379 = vunpack.c.l.b16 %v1342
        %v1380 = vunpack.c.h.b16 %v1342
        %v1381 = vunpack.c.l.b16 %v1343
        %v1382 = vunpack.c.l.b16 %v1344
        %v1383 = vunpack.c.h.b16 %v1344
        %v1384 = vunpack.c.l.b16 %v1345
        %v1385 = vunpack.c.l.b16 %v1346
        %v1386 = vunpack.c.h.b16 %v1346
        %v1387 = vunpack.c.l.b16 %v1347
        %v1388 = vpack.c.b16 %v1364, %v1364
        %v1389 = vpack.c.b16 %v1365, %v1365
        %v1390 = vpack.c.b16 %v1366, %v1366
        %v1391 = vpack.c.b16 %v1367, %v1367
        %v1392 = vpack.c.b16 %v1368, %v1368
        %v1393 = vpack.c.b16 %v1369, %v1369
        %v1394 = vpack.c.b16 %v1370, %v1370
        %v1395 = vpack.c.b16 %v1371, %v1371
        %v1396 = vpack.c.b16 %v1372, %v1372
        %v1397 = vpack.c.b16 %v1373, %v1373
        %v1398 = vpack.c.b16 %v1374, %v1374
        %v1399 = vpack.c.b16 %v1375, %v1375
        %v1400 = vpack.c.b16 %v1376, %v1376
        %v1401 = vpack.c.b16 %v1377, %v1377
        %v1402 = vpack.c.b16 %v1378, %v1378
        %v1403 = vpack.c.b16 %v1379, %v1379
        %v1404 = vpack.c.b16 %v1380, %v1380
        %v1405 = vpack.c.b16 %v1381, %v1381
        %v1406 = vpack.c.b16 %v1382, %v1382
        %v1407 = vpack.c.b16 %v1383, %v1383
        %v1408 = vpack.c.b16 %v1384, %v1384
        %v1409 = vpack.c.b16 %v1385, %v1385
        %v1410 = vpack.c.b16 %v1386, %v1386
        %v1411 = vpack.c.b16 %v1387, %v1387
        %1412 = vrot.lane.b32.xlu0 %v1388, 64
        %v1413 = vpop.permute.xlu0 %1412
        %1414 = vrot.lane.b32.xlu0 %v1389, 64
        %v1415 = vpop.permute.xlu0 %1414
        %1416 = vrot.lane.b32.xlu0 %v1390, 64
        %v1417 = vpop.permute.xlu0 %1416
        %1418 = vrot.lane.b32.xlu0 %v1391, 64
        %v1419 = vpop.permute.xlu0 %1418
        %1420 = vrot.lane.b32.xlu0 %v1392, 64
        %v1421 = vpop.permute.xlu0 %1420
        %1422 = vrot.lane.b32.xlu0 %v1393, 64
        %v1423 = vpop.permute.xlu0 %1422
        %1424 = vrot.lane.b32.xlu0 %v1394, 64
        %v1425 = vpop.permute.xlu0 %1424
        %1426 = vrot.lane.b32.xlu0 %v1395, 64
        %v1427 = vpop.permute.xlu0 %1426
        %1428 = vrot.lane.b32.xlu0 %v1396, 64
        %v1429 = vpop.permute.xlu0 %1428
        %1430 = vrot.lane.b32.xlu0 %v1397, 64
        %v1431 = vpop.permute.xlu0 %1430
        %1432 = vrot.lane.b32.xlu0 %v1398, 64
        %v1433 = vpop.permute.xlu0 %1432
        %1434 = vrot.lane.b32.xlu0 %v1399, 64
        %v1435 = vpop.permute.xlu0 %1434
        %1436 = vrot.lane.b32.xlu0 %v1400, 64
        %v1437 = vpop.permute.xlu0 %1436
        %1438 = vrot.lane.b32.xlu0 %v1401, 64
        %v1439 = vpop.permute.xlu0 %1438
        %1440 = vrot.lane.b32.xlu0 %v1402, 64
        %v1441 = vpop.permute.xlu0 %1440
        %1442 = vrot.lane.b32.xlu0 %v1403, 64
        %v1443 = vpop.permute.xlu0 %1442
        %1444 = vrot.lane.b32.xlu0 %v1404, 64
        %v1445 = vpop.permute.xlu0 %1444
        %1446 = vrot.lane.b32.xlu0 %v1405, 64
        %v1447 = vpop.permute.xlu0 %1446
        %1448 = vrot.lane.b32.xlu0 %v1406, 64
        %v1449 = vpop.permute.xlu0 %1448
        %1450 = vrot.lane.b32.xlu0 %v1407, 64
        %v1451 = vpop.permute.xlu0 %1450
        %1452 = vrot.lane.b32.xlu0 %v1408, 64
        %v1453 = vpop.permute.xlu0 %1452
        %1454 = vrot.lane.b32.xlu0 %v1409, 64
        %v1455 = vpop.permute.xlu0 %1454
        %1456 = vrot.lane.b32.xlu0 %v1410, 64
        %v1457 = vpop.permute.xlu0 %1456
        %1458 = vrot.lane.b32.xlu0 %v1411, 64
        %v1459 = vpop.permute.xlu0 %1458
        %vm1484 = vcmask 519168
        %1485 = vst.msk [vmem:[%s361] sm:$0xf] %vm1484, %v1413
        %1486 = vst.msk [vmem:[%s361 + $0x4] sm:$0xf] %vm1484, %v1415
        %1487 = vst.msk [vmem:[%s361 + $0x8] sm:$0xf] %vm1484, %v1417
        %1488 = vst.msk [vmem:[%s361 + $0xc] sm:$0xf] %vm1484, %v1419
        %1489 = vst.msk [vmem:[%s361 + $0x10] sm:$0xf] %vm1484, %v1421
        %1490 = vst.msk [vmem:[%s361 + $0x14] sm:$0xf] %vm1484, %v1423
        %1491 = vst.msk [vmem:[%s361 + $0x18] sm:$0xf] %vm1484, %v1425
        %1492 = vst.msk [vmem:[%s361 + $0x1c] sm:$0xf] %vm1484, %v1427
        %1493 = vst.msk [vmem:[%s361 + $0x20] sm:$0xf] %vm1484, %v1429
        %1494 = vst.msk [vmem:[%s361 + $0x24] sm:$0xf] %vm1484, %v1431
        %1495 = vst.msk [vmem:[%s361 + $0x28] sm:$0xf] %vm1484, %v1433
        %1496 = vst.msk [vmem:[%s361 + $0x2c] sm:$0xf] %vm1484, %v1435
        %1497 = vst.msk [vmem:[%s361 + $0x30] sm:$0xf] %vm1484, %v1437
        %1498 = vst.msk [vmem:[%s361 + $0x34] sm:$0xf] %vm1484, %v1439
        %1499 = vst.msk [vmem:[%s361 + $0x38] sm:$0xf] %vm1484, %v1441
        %1500 = vst.msk [vmem:[%s361 + $0x3c] sm:$0xf] %vm1484, %v1443
        %1501 = vst.msk [vmem:[%s361 + $0x40] sm:$0xf] %vm1484, %v1445
        %1502 = vst.msk [vmem:[%s361 + $0x44] sm:$0xf] %vm1484, %v1447
        %1503 = vst.msk [vmem:[%s361 + $0x48] sm:$0xf] %vm1484, %v1449
        %1504 = vst.msk [vmem:[%s361 + $0x4c] sm:$0xf] %vm1484, %v1451
        %1505 = vst.msk [vmem:[%s361 + $0x50] sm:$0xf] %vm1484, %v1453
        %1506 = vst.msk [vmem:[%s361 + $0x54] sm:$0xf] %vm1484, %v1455
        %1507 = vst.msk [vmem:[%s361 + $0x58] sm:$0xf] %vm1484, %v1457
        %1508 = vst.msk [vmem:[%s361 + $0x5c] sm:$0xf] %vm1484, %v1459
        %vm1509 = vcmask 516096
        %vm1510 = vsmask.f32 256
        %vm1511 = vmand %vm1509, %vm1510
        %v1512 = vld [vmem:[%s361] sm:$0x1]
        %v1513 = vsel %vm1511, 0, %v1512
        %1514 = vst [vmem:[%s361] sm:$0x1] %v1513
        %v1515 = vld [vmem:[%s361 + $0xc] sm:$0x1]
        %v1516 = vsel %vm1511, 0, %v1515
        %1517 = vst [vmem:[%s361 + $0xc] sm:$0x1] %v1516
        %v1518 = vld [vmem:[%s361 + $0x18] sm:$0x1]
        %v1519 = vsel %vm1511, 0, %v1518
        %1520 = vst [vmem:[%s361 + $0x18] sm:$0x1] %v1519
        %v1521 = vld [vmem:[%s361 + $0x24] sm:$0x1]
        %v1522 = vsel %vm1511, 0, %v1521
        %1523 = vst [vmem:[%s361 + $0x24] sm:$0x1] %v1522
        %v1524 = vld [vmem:[%s361 + $0x30] sm:$0x1]
        %v1525 = vsel %vm1511, 0, %v1524
        %1526 = vst [vmem:[%s361 + $0x30] sm:$0x1] %v1525
        %v1527 = vld [vmem:[%s361 + $0x3c] sm:$0x1]
        %v1528 = vsel %vm1511, 0, %v1527
        %1529 = vst [vmem:[%s361 + $0x3c] sm:$0x1] %v1528
        %v1530 = vld [vmem:[%s361 + $0x48] sm:$0x1]
        %v1531 = vsel %vm1511, 0, %v1530
        %1532 = vst [vmem:[%s361 + $0x48] sm:$0x1] %v1531
        %v1533 = vld [vmem:[%s361 + $0x54] sm:$0x1]
        %v1534 = vsel %vm1511, 0, %v1533
        %1535 = vst [vmem:[%s361 + $0x54] sm:$0x1] %v1534
        %vm1536 = vcmask 519168
        %vm1537 = vsmask.f32 7938
        %vm1538 = vmand %vm1536, %vm1537
        %v1539 = vld [vmem:[%s361 + $0x8] sm:$0xf]
        %v1540 = vsel %vm1538, 0, %v1539
        %1541 = vst [vmem:[%s361 + $0x8] sm:$0xf] %v1540
        %v1542 = vld [vmem:[%s361 + $0x14] sm:$0xf]
        %v1543 = vsel %vm1538, 0, %v1542
        %1544 = vst [vmem:[%s361 + $0x14] sm:$0xf] %v1543
        %v1545 = vld [vmem:[%s361 + $0x20] sm:$0xf]
        %v1546 = vsel %vm1538, 0, %v1545
        %1547 = vst [vmem:[%s361 + $0x20] sm:$0xf] %v1546
        %v1548 = vld [vmem:[%s361 + $0x2c] sm:$0xf]
        %v1549 = vsel %vm1538, 0, %v1548
        %1550 = vst [vmem:[%s361 + $0x2c] sm:$0xf] %v1549
        %v1551 = vld [vmem:[%s361 + $0x38] sm:$0xf]
        %v1552 = vsel %vm1538, 0, %v1551
        %1553 = vst [vmem:[%s361 + $0x38] sm:$0xf] %v1552
        %v1554 = vld [vmem:[%s361 + $0x44] sm:$0xf]
        %v1555 = vsel %vm1538, 0, %v1554
        %1556 = vst [vmem:[%s361 + $0x44] sm:$0xf] %v1555
        %v1557 = vld [vmem:[%s361 + $0x50] sm:$0xf]
        %v1558 = vsel %vm1538, 0, %v1557
        %1559 = vst [vmem:[%s361 + $0x50] sm:$0xf] %v1558
        %v1560 = vld [vmem:[%s361 + $0x5c] sm:$0xf]
        %v1561 = vsel %vm1538, 0, %v1560
        %1562 = vst [vmem:[%s361 + $0x5c] sm:$0xf] %v1561
        %s1563 = sand.u32 %s205, 1
        %s1564 = scalar_lea.sflag [#allocation4], %s1563
        %s1565 = sand.u32 %s205, 1
        %s1566 = smul.addr %s1565, 96
        %s1567 = scalar_lea.vmem [#allocation3], %s1566
        // Predicated region
        $region61: #{tpu_custom_call.1} parent=43 // pred_check
          %p1568 = pneg %p215
        $region62: #{tpu_custom_call.1} parent=43 // pred_check_branch
          %1570 = sbr.rel (%p1568) target = $region64
        $region63: #{tpu_custom_call.1} parent=43 // pred_region
          %s1571 = smul.u32 8, %s25
          %s1573 = ssub.s32 1536, 1536
          %1574 = vsyncadd %s1564, %s1573
          %s1575 = smul.addr %s1571, 3
          %s1576 = smul.addr %s24, 48
          %s1577 = sadd.s32 %s1575, %s1576
          %s1578 = smul.addr %s1577, 64
          %s1579 = scalar_lea.hbm %s6, %s1578
          %s1580 = sshll.u32 %s1567, 4
          %s1581 = int_to_ptr.vmem [resolvable:$true] %s1580
          %1586 = dma.vmem_to_hbm [thread:$0]  %s1581, 1536, %s1579, %s1564, 64, 64, 4
        $region64: #{tpu_custom_call.1} parent=43 // pred_fallthru
          _
      $region44: #{tpu_custom_call.1} parent=5 // pred_fallthru
        _
      %p1587 = scmp.le.s32.totalorder 2, %s15
      // Predicated region
      $region65: #{tpu_custom_call.1} parent=5 // pred_check
        %p1588 = pneg %p1587
      $region66: #{tpu_custom_call.1} parent=5 // pred_check_branch
        %1590 = sbr.rel (%p1588) target = $region68
      $region67: #{tpu_custom_call.1} parent=5 // pred_region
        %s1591 = ssub.s32 %s15, 2
        // Predicated region
        $region69: #{tpu_custom_call.1} parent=67 // pred_check
          %p1592 = pneg %p221
        $region70: #{tpu_custom_call.1} parent=67 // pred_check_branch
          %1594 = sbr.rel (%p1592) target = $region72
        $region71: #{tpu_custom_call.1} parent=67 // pred_region
          %s1595 = sand.u32 %s206, 1
          %s1596 = scalar_lea.sflag [#allocation4], %s1595
          %s1597 = sand.u32 %s206, 1
          %s1598 = smul.addr %s1597, 96
          %s1599 = scalar_lea.vmem [#allocation3], %s1598
          %1600 = dma.done %s1596, 1536
        $region72: #{tpu_custom_call.1} parent=67 // pred_fallthru
          _
      $region68: #{tpu_custom_call.1} parent=5 // pred_fallthru
        _
    $region6: #{tpu_custom_call.1} parent=1 // loop_footer
      %s19 = sadd.s32 1, %s15
    $region7: #{tpu_custom_call.1} parent=1 // loop_footer_branch
      %14 = sbr.rel target = $region3
    $region8: #{tpu_custom_call.1} parent=1 // loop_exit
      _
    %1601 = vsyncpa [#allocation4], 1
    %s1602 = scalar_lea.sflag [#allocation4], 1
    %1603 = vsyncpa %s1602, 1

</llo_original>
